<compile_context>
chip_gen: v5e
topology: v5e:2x2
jax: 0.10.0
libtpu: 0.0.40
codegen_flags: <defaults>
</compile_context>

<pallas_src>
import numpy as np
import jax
import jax.numpy as jnp
from jax.experimental import pallas as pl
from jax.experimental.pallas import tpu as pltpu

FEATURE_SIZE = 9
CHANNELS     = [1, 2, 4, 8, 16, 32, 64, 32, 16]   # conv1..conv8 in/out channels (torch)
CHANNELS_PAD = [1, 8, 8, 8, 16, 32, 64, 32, 16]   # conv1/conv2 channels zero-padded to 8
CONV_LENGTHS = [9, 9, 7, 7, 5, 5, 3, 3]           # sequence length seen by each conv


# ----------------------------- Pallas kernel ---------------------------------

def cnn_kernel(x_ref,
               w1, b1, w2, b2, w3, b3, w4, b4,
               w5, b5, w6, b6, w7, b7, w8, b8,
               wf, bf, out_ref):
    """One batch block. Activation layout: (L*C, B_TILE); batch dense on the lane axis."""

    def conv(h, w_ref, b_ref):
        # Folded conv = one bf16 MXU matmul with f32 accumulation; bias + ReLU in f32.
        y = jnp.dot(w_ref[...], h.astype(jnp.bfloat16),
                    preferred_element_type=jnp.float32)
        return jnp.maximum(y + b_ref[...], 0.0)

    def pool(h, c):
        # MaxPool1d(k=3, s=1) over positions; rows are position-major, channel-minor.
        inner = h.shape[0] - 2 * c
        return jnp.maximum(jnp.maximum(h[:inner, :], h[c:c + inner, :]),
                           h[2 * c:2 * c + inner, :])

    # (bt, 9) input tile -> (9, bt): batch stays dense on the lane axis for all layers.
    h = x_ref[...].T                          # (9*1,  B)
    h = conv(h, w1, b1)                       # (9*8,  B)   out channels padded 2 -> 8
    h = conv(h, w2, b2)                       # (9*8,  B)   out channels padded 4 -> 8
    h = pool(h, 8)                            # (7*8,  B)
    h = conv(h, w3, b3)                       # (7*8,  B)
    h = conv(h, w4, b4)                       # (7*16, B)
    h = pool(h, 16)                           # (5*16, B)
    h = conv(h, w5, b5)                       # (5*32, B)
    h = conv(h, w6, b6)                       # (5*64, B)
    h = pool(h, 64)                           # (3*64, B)
    h = conv(h, w7, b7)                       # (3*32, B)
    h = conv(h, w8, b8)                       # (3*16, B)
    h = pool(h, 16)                           # (1*16, B)
    # fc: (1,16) @ (16,B) + bias -> lane-dense (1, B) output block.
    out_ref[...] = (jnp.dot(wf[...], h.astype(jnp.bfloat16),
                            preferred_element_type=jnp.float32) + bf[...])


# ------------------------------- host-side prep -------------------------------

def _dense_conv(w, b, L, cin_pad, cout_pad):
    """Fold a same-padded k=3 Conv1d into a dense (L*cout_pad, L*cin_pad) bf16 matrix
    plus an f32 bias column.

    Row index = out_pos*cout_pad + out_ch ; col index = in_pos*cin_pad + in_ch.
    Conv zero padding and channel padding are baked in as zero blocks: padded output
    channels carry exact zeros through bias/ReLU/pool and are ignored by the next
    layer's zero columns, so numerics are identical to the unpadded model.
    """
    w = np.asarray(w, np.float32)             # (Cout, Cin, 3), torch layout
    b = np.asarray(b, np.float32)             # (Cout,)
    Cout, Cin, K = w.shape
    Wd = np.zeros((L * cout_pad, L * cin_pad), np.float32)
    bd = np.zeros((L * cout_pad, 1), np.float32)
    for l in range(L):
        bd[l * cout_pad:l * cout_pad + Cout, 0] = b
        for k in range(K):
            lp = l + k - 1                    # input position (padding = 1)
            if 0 <= lp < L:
                Wd[l * cout_pad:l * cout_pad + Cout,
                   lp * cin_pad:lp * cin_pad + Cin] = w[:, :, k]
    return jnp.asarray(Wd, jnp.bfloat16), jnp.asarray(bd, jnp.float32)


def _round_up(x, m):
    return ((x + m - 1) // m) * m


def _choose_tiling(B, b_tile):
    """Pick a lane tile (multiple of 128) and block count: >= 2 blocks whenever the
    batch allows (v7x megacore), rebalanced to minimize tail padding."""
    b_tile = max(128, _round_up(int(b_tile), 128))
    bt = min(b_tile, max(128, _round_up(pl.cdiv(B, 2), 128)))
    nb = pl.cdiv(B, bt)
    bt = max(128, _round_up(pl.cdiv(B, nb), 128))   # even out blocks -> less tail waste
    nb = pl.cdiv(B, bt)
    return bt, nb


# ------------------------------- wrapper --------------------------------------

def cnn_forward(x, params, b_tile=2048):
    """x: (B, FEATURE_SIZE) -> (B,) float32, matching CNN.forward. Sweep b_tile 1024-4096."""
    x = jnp.asarray(x, jnp.float32)
    B = x.shape[0]
    bt, nb = _choose_tiling(B, b_tile)
    b_pad = nb * bt

    kernel_args = [x]
    # Ragged last batch block is handled by Pallas boundary blocks; the garbage tail
    # lanes are computed in isolation (never contracted with valid lanes) and dropped.
    in_specs = [pl.BlockSpec((bt, FEATURE_SIZE), lambda b: (b, 0))]

    weight_elems = 0
    for i, ((w, bias), L) in enumerate(zip(params["convs"], CONV_LENGTHS)):
        Wd, bd = _dense_conv(w, bias, L, CHANNELS_PAD[i], CHANNELS_PAD[i + 1])
        weight_elems += Wd.shape[0] * Wd.shape[1]
        kernel_args += [Wd, bd]
        in_specs += [pl.BlockSpec(Wd.shape, lambda b: (0, 0)),
                     pl.BlockSpec(bd.shape, lambda b: (0, 0))]

    wfc, bfc = params["fc"]                   # (1, 16), (1,)
    wf = jnp.asarray(wfc, jnp.bfloat16).reshape(1, 16)
    bf = jnp.asarray(bfc, jnp.float32).reshape(1, 1)
    weight_elems += 16
    kernel_args += [wf, bf]
    in_specs += [pl.BlockSpec(wf.shape, lambda b: (0, 0)),
                 pl.BlockSpec(bf.shape, lambda b: (0, 0))]

    out = pl.pallas_call(
        cnn_kernel,
        out_shape=jax.ShapeDtypeStruct((1, b_pad), jnp.float32),
        grid=(nb,),
        in_specs=in_specs,
        out_specs=pl.BlockSpec((1, bt), lambda b: (0, b)),     # flat, lane-dense stores
        compiler_params=pltpu.CompilerParams(
            dimension_semantics=("parallel",),                 # batch blocks shard across TCs
            vmem_limit_bytes=32 * 1024 * 1024),                # v5e default scoped limit is 16 MiB
        cost_estimate=pl.CostEstimate(
            flops=2 * weight_elems * b_pad,
            transcendentals=0,
            bytes_accessed=b_pad * (FEATURE_SIZE + 1) * 4 + 2 * weight_elems),
    )(*kernel_args)

    return out.reshape(-1)[:B]                # matches PyTorch's final .squeeze()


# --------------------------- params & reference -------------------------------

def init_params(key):
    convs = []
    for i in range(8):
        cin, cout = CHANNELS[i], CHANNELS[i + 1]
        key, kw, kb = jax.random.split(key, 3)
        bound = 1.0 / (cin * 3) ** 0.5        # PyTorch-style uniform bound, deterministic
        w = jax.random.uniform(kw, (cout, cin, 3), jnp.float32, -bound, bound)
        b = jax.random.uniform(kb, (cout,), jnp.float32, -bound, bound)
        convs.append((w, b))
    key, kw, kb = jax.random.split(key, 3)
    bound = 1.0 / 16 ** 0.5
    wfc = jax.random.uniform(kw, (1, 16), jnp.float32, -bound, bound)
    bfc = jax.random.uniform(kb, (1,), jnp.float32, -bound, bound)
    return {"convs": convs, "fc": (wfc, bfc)}


def ref_forward(x, params):
    """Pure-JAX f32 reference of the PyTorch forward (NCW layout), for validation."""
    h = x.reshape(-1, 1, FEATURE_SIZE)

    def conv(h, w, b):
        y = jax.lax.conv_general_dilated(h, w, window_strides=(1,), padding=((1, 1),),
                                         dimension_numbers=("NCH", "OIH", "NCH"))
        return jax.nn.relu(y + b[None, :, None])

    def pool(h):
        return jnp.maximum(jnp.maximum(h[:, :, :-2], h[:, :, 1:-1]), h[:, :, 2:])

    cs = params["convs"]
    h = conv(h, *cs[0]); h = conv(h, *cs[1]); h = pool(h)
    h = conv(h, *cs[2]); h = conv(h, *cs[3]); h = pool(h)
    h = conv(h, *cs[4]); h = conv(h, *cs[5]); h = pool(h)
    h = conv(h, *cs[6]); h = conv(h, *cs[7]); h = pool(h)
    feat = h[:, :, 0]                         # (B, 16)
    wfc, bfc = params["fc"]
    return (feat @ wfc.T + bfc).reshape(-1)


# ----------------------------------- main --------------------------------------

if __name__ == "__main__":
    key = jax.random.PRNGKey(0)
    kx, kp = jax.random.split(key)
    B = 200                                   # non-multiple of 128: exercises the ragged
                                              # boundary block AND the nb=2 multi-block path
    x = jax.random.normal(kx, (B, FEATURE_SIZE), jnp.float32)
    params = init_params(kp)

    y = cnn_forward(x, params)
    jax.block_until_ready(y)

    y_ref = ref_forward(x, params)
    assert y.shape == (B,)
    # bf16 MXU operands with f32 accumulation -> loosened tolerance vs. the f32 reference.
    assert jnp.allclose(y, y_ref, atol=1e-2, rtol=1e-2), (
        float(jnp.max(jnp.abs(y - y_ref))), y[:5], y_ref[:5])
    print("KERNEL_OK")
</pallas_src>

<mosaic_0001>
module attributes {stable_mosaic.version = 11 : i64} {
  func.func @cnn_kernel(%arg0: i32, %arg1: memref<128x9xf32, #tpu.memory_space<vmem>>, %arg2: memref<72x9xbf16, #tpu.memory_space<vmem>>, %arg3: memref<72x1xf32, #tpu.memory_space<vmem>>, %arg4: memref<72x72xbf16, #tpu.memory_space<vmem>>, %arg5: memref<72x1xf32, #tpu.memory_space<vmem>>, %arg6: memref<56x56xbf16, #tpu.memory_space<vmem>>, %arg7: memref<56x1xf32, #tpu.memory_space<vmem>>, %arg8: memref<112x56xbf16, #tpu.memory_space<vmem>>, %arg9: memref<112x1xf32, #tpu.memory_space<vmem>>, %arg10: memref<160x80xbf16, #tpu.memory_space<vmem>>, %arg11: memref<160x1xf32, #tpu.memory_space<vmem>>, %arg12: memref<320x160xbf16, #tpu.memory_space<vmem>>, %arg13: memref<320x1xf32, #tpu.memory_space<vmem>>, %arg14: memref<96x192xbf16, #tpu.memory_space<vmem>>, %arg15: memref<96x1xf32, #tpu.memory_space<vmem>>, %arg16: memref<48x96xbf16, #tpu.memory_space<vmem>>, %arg17: memref<48x1xf32, #tpu.memory_space<vmem>>, %arg18: memref<1x16xbf16, #tpu.memory_space<vmem>>, %arg19: memref<1x1xf32, #tpu.memory_space<vmem>>, %arg20: memref<1x128xf32, #tpu.memory_space<vmem>>) attributes {dimension_semantics = [#tpu.dimension_semantics<parallel>], iteration_bounds = array<i64: 2>, scalar_prefetch = 0 : i64, scratch_operands = 0 : i64, tpu.core_type = #tpu.core_type<tc>, window_params = [{transform_indices = @transform_0, window_bounds = array<i64: 128, 9>}, {pipeline_mode = #tpu.pipeline_mode<synchronous>, transform_indices = @transform_1, window_bounds = array<i64: 72, 9>}, {pipeline_mode = #tpu.pipeline_mode<synchronous>, transform_indices = @transform_2, window_bounds = array<i64: 72, 1>}, {pipeline_mode = #tpu.pipeline_mode<synchronous>, transform_indices = @transform_3, window_bounds = array<i64: 72, 72>}, {pipeline_mode = #tpu.pipeline_mode<synchronous>, transform_indices = @transform_4, window_bounds = array<i64: 72, 1>}, {pipeline_mode = #tpu.pipeline_mode<synchronous>, transform_indices = @transform_5, window_bounds = array<i64: 56, 56>}, {pipeline_mode = #tpu.pipeline_mode<synchronous>, transform_indices = @transform_6, window_bounds = array<i64: 56, 1>}, {pipeline_mode = #tpu.pipeline_mode<synchronous>, transform_indices = @transform_7, window_bounds = array<i64: 112, 56>}, {pipeline_mode = #tpu.pipeline_mode<synchronous>, transform_indices = @transform_8, window_bounds = array<i64: 112, 1>}, {pipeline_mode = #tpu.pipeline_mode<synchronous>, transform_indices = @transform_9, window_bounds = array<i64: 160, 80>}, {pipeline_mode = #tpu.pipeline_mode<synchronous>, transform_indices = @transform_10, window_bounds = array<i64: 160, 1>}, {pipeline_mode = #tpu.pipeline_mode<synchronous>, transform_indices = @transform_11, window_bounds = array<i64: 320, 160>}, {pipeline_mode = #tpu.pipeline_mode<synchronous>, transform_indices = @transform_12, window_bounds = array<i64: 320, 1>}, {pipeline_mode = #tpu.pipeline_mode<synchronous>, transform_indices = @transform_13, window_bounds = array<i64: 96, 192>}, {pipeline_mode = #tpu.pipeline_mode<synchronous>, transform_indices = @transform_14, window_bounds = array<i64: 96, 1>}, {pipeline_mode = #tpu.pipeline_mode<synchronous>, transform_indices = @transform_15, window_bounds = array<i64: 48, 96>}, {pipeline_mode = #tpu.pipeline_mode<synchronous>, transform_indices = @transform_16, window_bounds = array<i64: 48, 1>}, {pipeline_mode = #tpu.pipeline_mode<synchronous>, transform_indices = @transform_17, window_bounds = array<i64: 1, 16>}, {pipeline_mode = #tpu.pipeline_mode<synchronous>, transform_indices = @transform_18, window_bounds = array<i64: 1, 1>}, {transform_indices = @transform_19, window_bounds = array<i64: 1, 128>}]} {
    %c0 = arith.constant 0 : index
    %c0_0 = arith.constant 0 : index
    %0 = vector.load %arg1[%c0, %c0_0] : memref<128x9xf32, #tpu.memory_space<vmem>>, vector<128x9xf32>
    %1 = tpu.transpose %0, [1, 0] : vector<128x9xf32> -> vector<9x128xf32>
    %c0_1 = arith.constant 0 : index
    %c0_2 = arith.constant 0 : index
    %2 = vector.load %arg2[%c0_1, %c0_2] : memref<72x9xbf16, #tpu.memory_space<vmem>>, vector<72x9xbf16>
    %3 = arith.truncf %1 : vector<9x128xf32> to vector<9x128xbf16>
    %cst = arith.constant dense<0.000000e+00> : vector<72x128xf32>
    %4 = tpu.matmul %2, %3, %cst {dimension_numbers = #tpu.dot_dimension_numbers<[1], [0], [0], [1], [0, 0, 1, 1], [], []>} : vector<72x9xbf16>, vector<9x128xbf16>, vector<72x128xf32> -> vector<72x128xf32>
    %c0_3 = arith.constant 0 : index
    %c0_4 = arith.constant 0 : index
    %5 = vector.load %arg3[%c0_3, %c0_4] : memref<72x1xf32, #tpu.memory_space<vmem>>, vector<72x1xf32>
    %6 = vector.broadcast %5 : vector<72x1xf32> to vector<72x128xf32>
    %7 = arith.addf %4, %6 : vector<72x128xf32>
    %cst_5 = arith.constant 0.000000e+00 : f32
    %8 = vector.broadcast %cst_5 : f32 to vector<72x128xf32>
    %9 = arith.maximumf %7, %8 : vector<72x128xf32>
    %c0_6 = arith.constant 0 : index
    %c0_7 = arith.constant 0 : index
    %10 = vector.load %arg4[%c0_6, %c0_7] : memref<72x72xbf16, #tpu.memory_space<vmem>>, vector<72x72xbf16>
    %11 = arith.truncf %9 : vector<72x128xf32> to vector<72x128xbf16>
    %cst_8 = arith.constant dense<0.000000e+00> : vector<72x128xf32>
    %12 = tpu.matmul %10, %11, %cst_8 {dimension_numbers = #tpu.dot_dimension_numbers<[1], [0], [0], [1], [0, 0, 1, 1], [], []>} : vector<72x72xbf16>, vector<72x128xbf16>, vector<72x128xf32> -> vector<72x128xf32>
    %c0_9 = arith.constant 0 : index
    %c0_10 = arith.constant 0 : index
    %13 = vector.load %arg5[%c0_9, %c0_10] : memref<72x1xf32, #tpu.memory_space<vmem>>, vector<72x1xf32>
    %14 = vector.broadcast %13 : vector<72x1xf32> to vector<72x128xf32>
    %15 = arith.addf %12, %14 : vector<72x128xf32>
    %cst_11 = arith.constant 0.000000e+00 : f32
    %16 = vector.broadcast %cst_11 : f32 to vector<72x128xf32>
    %17 = arith.maximumf %15, %16 : vector<72x128xf32>
    %18 = vector.extract_strided_slice %17 {offsets = [0, 0], sizes = [56, 128], strides = [1, 1]} : vector<72x128xf32> to vector<56x128xf32>
    %19 = vector.extract_strided_slice %17 {offsets = [8, 0], sizes = [56, 128], strides = [1, 1]} : vector<72x128xf32> to vector<56x128xf32>
    %20 = arith.maximumf %18, %19 : vector<56x128xf32>
    %21 = vector.extract_strided_slice %17 {offsets = [16, 0], sizes = [56, 128], strides = [1, 1]} : vector<72x128xf32> to vector<56x128xf32>
    %22 = arith.maximumf %20, %21 : vector<56x128xf32>
    %c0_12 = arith.constant 0 : index
    %c0_13 = arith.constant 0 : index
    %23 = vector.load %arg6[%c0_12, %c0_13] : memref<56x56xbf16, #tpu.memory_space<vmem>>, vector<56x56xbf16>
    %24 = arith.truncf %22 : vector<56x128xf32> to vector<56x128xbf16>
    %cst_14 = arith.constant dense<0.000000e+00> : vector<56x128xf32>
    %25 = tpu.matmul %23, %24, %cst_14 {dimension_numbers = #tpu.dot_dimension_numbers<[1], [0], [0], [1], [0, 0, 1, 1], [], []>} : vector<56x56xbf16>, vector<56x128xbf16>, vector<56x128xf32> -> vector<56x128xf32>
    %c0_15 = arith.constant 0 : index
    %c0_16 = arith.constant 0 : index
    %26 = vector.load %arg7[%c0_15, %c0_16] : memref<56x1xf32, #tpu.memory_space<vmem>>, vector<56x1xf32>
    %27 = vector.broadcast %26 : vector<56x1xf32> to vector<56x128xf32>
    %28 = arith.addf %25, %27 : vector<56x128xf32>
    %cst_17 = arith.constant 0.000000e+00 : f32
    %29 = vector.broadcast %cst_17 : f32 to vector<56x128xf32>
    %30 = arith.maximumf %28, %29 : vector<56x128xf32>
    %c0_18 = arith.constant 0 : index
    %c0_19 = arith.constant 0 : index
    %31 = vector.load %arg8[%c0_18, %c0_19] : memref<112x56xbf16, #tpu.memory_space<vmem>>, vector<112x56xbf16>
    %32 = arith.truncf %30 : vector<56x128xf32> to vector<56x128xbf16>
    %cst_20 = arith.constant dense<0.000000e+00> : vector<112x128xf32>
    %33 = tpu.matmul %31, %32, %cst_20 {dimension_numbers = #tpu.dot_dimension_numbers<[1], [0], [0], [1], [0, 0, 1, 1], [], []>} : vector<112x56xbf16>, vector<56x128xbf16>, vector<112x128xf32> -> vector<112x128xf32>
    %c0_21 = arith.constant 0 : index
    %c0_22 = arith.constant 0 : index
    %34 = vector.load %arg9[%c0_21, %c0_22] : memref<112x1xf32, #tpu.memory_space<vmem>>, vector<112x1xf32>
    %35 = vector.broadcast %34 : vector<112x1xf32> to vector<112x128xf32>
    %36 = arith.addf %33, %35 : vector<112x128xf32>
    %cst_23 = arith.constant 0.000000e+00 : f32
    %37 = vector.broadcast %cst_23 : f32 to vector<112x128xf32>
    %38 = arith.maximumf %36, %37 : vector<112x128xf32>
    %39 = vector.extract_strided_slice %38 {offsets = [0, 0], sizes = [80, 128], strides = [1, 1]} : vector<112x128xf32> to vector<80x128xf32>
    %40 = vector.extract_strided_slice %38 {offsets = [16, 0], sizes = [80, 128], strides = [1, 1]} : vector<112x128xf32> to vector<80x128xf32>
    %41 = arith.maximumf %39, %40 : vector<80x128xf32>
    %42 = vector.extract_strided_slice %38 {offsets = [32, 0], sizes = [80, 128], strides = [1, 1]} : vector<112x128xf32> to vector<80x128xf32>
    %43 = arith.maximumf %41, %42 : vector<80x128xf32>
    %c0_24 = arith.constant 0 : index
    %c0_25 = arith.constant 0 : index
    %44 = vector.load %arg10[%c0_24, %c0_25] : memref<160x80xbf16, #tpu.memory_space<vmem>>, vector<160x80xbf16>
    %45 = arith.truncf %43 : vector<80x128xf32> to vector<80x128xbf16>
    %cst_26 = arith.constant dense<0.000000e+00> : vector<160x128xf32>
    %46 = tpu.matmul %44, %45, %cst_26 {dimension_numbers = #tpu.dot_dimension_numbers<[1], [0], [0], [1], [0, 0, 1, 1], [], []>} : vector<160x80xbf16>, vector<80x128xbf16>, vector<160x128xf32> -> vector<160x128xf32>
    %c0_27 = arith.constant 0 : index
    %c0_28 = arith.constant 0 : index
    %47 = vector.load %arg11[%c0_27, %c0_28] : memref<160x1xf32, #tpu.memory_space<vmem>>, vector<160x1xf32>
    %48 = vector.broadcast %47 : vector<160x1xf32> to vector<160x128xf32>
    %49 = arith.addf %46, %48 : vector<160x128xf32>
    %cst_29 = arith.constant 0.000000e+00 : f32
    %50 = vector.broadcast %cst_29 : f32 to vector<160x128xf32>
    %51 = arith.maximumf %49, %50 : vector<160x128xf32>
    %c0_30 = arith.constant 0 : index
    %c0_31 = arith.constant 0 : index
    %52 = vector.load %arg12[%c0_30, %c0_31] : memref<320x160xbf16, #tpu.memory_space<vmem>>, vector<320x160xbf16>
    %53 = arith.truncf %51 : vector<160x128xf32> to vector<160x128xbf16>
    %cst_32 = arith.constant dense<0.000000e+00> : vector<320x128xf32>
    %54 = tpu.matmul %52, %53, %cst_32 {dimension_numbers = #tpu.dot_dimension_numbers<[1], [0], [0], [1], [0, 0, 1, 1], [], []>} : vector<320x160xbf16>, vector<160x128xbf16>, vector<320x128xf32> -> vector<320x128xf32>
    %c0_33 = arith.constant 0 : index
    %c0_34 = arith.constant 0 : index
    %55 = vector.load %arg13[%c0_33, %c0_34] : memref<320x1xf32, #tpu.memory_space<vmem>>, vector<320x1xf32>
    %56 = vector.broadcast %55 : vector<320x1xf32> to vector<320x128xf32>
    %57 = arith.addf %54, %56 : vector<320x128xf32>
    %cst_35 = arith.constant 0.000000e+00 : f32
    %58 = vector.broadcast %cst_35 : f32 to vector<320x128xf32>
    %59 = arith.maximumf %57, %58 : vector<320x128xf32>
    %60 = vector.extract_strided_slice %59 {offsets = [0, 0], sizes = [192, 128], strides = [1, 1]} : vector<320x128xf32> to vector<192x128xf32>
    %61 = vector.extract_strided_slice %59 {offsets = [64, 0], sizes = [192, 128], strides = [1, 1]} : vector<320x128xf32> to vector<192x128xf32>
    %62 = arith.maximumf %60, %61 : vector<192x128xf32>
    %63 = vector.extract_strided_slice %59 {offsets = [128, 0], sizes = [192, 128], strides = [1, 1]} : vector<320x128xf32> to vector<192x128xf32>
    %64 = arith.maximumf %62, %63 : vector<192x128xf32>
    %c0_36 = arith.constant 0 : index
    %c0_37 = arith.constant 0 : index
    %65 = vector.load %arg14[%c0_36, %c0_37] : memref<96x192xbf16, #tpu.memory_space<vmem>>, vector<96x192xbf16>
    %66 = arith.truncf %64 : vector<192x128xf32> to vector<192x128xbf16>
    %cst_38 = arith.constant dense<0.000000e+00> : vector<96x128xf32>
    %67 = tpu.matmul %65, %66, %cst_38 {dimension_numbers = #tpu.dot_dimension_numbers<[1], [0], [0], [1], [0, 0, 1, 1], [], []>} : vector<96x192xbf16>, vector<192x128xbf16>, vector<96x128xf32> -> vector<96x128xf32>
    %c0_39 = arith.constant 0 : index
    %c0_40 = arith.constant 0 : index
    %68 = vector.load %arg15[%c0_39, %c0_40] : memref<96x1xf32, #tpu.memory_space<vmem>>, vector<96x1xf32>
    %69 = vector.broadcast %68 : vector<96x1xf32> to vector<96x128xf32>
    %70 = arith.addf %67, %69 : vector<96x128xf32>
    %cst_41 = arith.constant 0.000000e+00 : f32
    %71 = vector.broadcast %cst_41 : f32 to vector<96x128xf32>
    %72 = arith.maximumf %70, %71 : vector<96x128xf32>
    %c0_42 = arith.constant 0 : index
    %c0_43 = arith.constant 0 : index
    %73 = vector.load %arg16[%c0_42, %c0_43] : memref<48x96xbf16, #tpu.memory_space<vmem>>, vector<48x96xbf16>
    %74 = arith.truncf %72 : vector<96x128xf32> to vector<96x128xbf16>
    %cst_44 = arith.constant dense<0.000000e+00> : vector<48x128xf32>
    %75 = tpu.matmul %73, %74, %cst_44 {dimension_numbers = #tpu.dot_dimension_numbers<[1], [0], [0], [1], [0, 0, 1, 1], [], []>} : vector<48x96xbf16>, vector<96x128xbf16>, vector<48x128xf32> -> vector<48x128xf32>
    %c0_45 = arith.constant 0 : index
    %c0_46 = arith.constant 0 : index
    %76 = vector.load %arg17[%c0_45, %c0_46] : memref<48x1xf32, #tpu.memory_space<vmem>>, vector<48x1xf32>
    %77 = vector.broadcast %76 : vector<48x1xf32> to vector<48x128xf32>
    %78 = arith.addf %75, %77 : vector<48x128xf32>
    %cst_47 = arith.constant 0.000000e+00 : f32
    %79 = vector.broadcast %cst_47 : f32 to vector<48x128xf32>
    %80 = arith.maximumf %78, %79 : vector<48x128xf32>
    %81 = vector.extract_strided_slice %80 {offsets = [0, 0], sizes = [16, 128], strides = [1, 1]} : vector<48x128xf32> to vector<16x128xf32>
    %82 = vector.extract_strided_slice %80 {offsets = [16, 0], sizes = [16, 128], strides = [1, 1]} : vector<48x128xf32> to vector<16x128xf32>
    %83 = arith.maximumf %81, %82 : vector<16x128xf32>
    %84 = vector.extract_strided_slice %80 {offsets = [32, 0], sizes = [16, 128], strides = [1, 1]} : vector<48x128xf32> to vector<16x128xf32>
    %85 = arith.maximumf %83, %84 : vector<16x128xf32>
    %c0_48 = arith.constant 0 : index
    %c0_49 = arith.constant 0 : index
    %86 = vector.load %arg18[%c0_48, %c0_49] : memref<1x16xbf16, #tpu.memory_space<vmem>>, vector<1x16xbf16>
    %87 = arith.truncf %85 : vector<16x128xf32> to vector<16x128xbf16>
    %cst_50 = arith.constant dense<0.000000e+00> : vector<1x128xf32>
    %88 = tpu.matmul %86, %87, %cst_50 {dimension_numbers = #tpu.dot_dimension_numbers<[1], [0], [0], [1], [0, 0, 1, 1], [], []>} : vector<1x16xbf16>, vector<16x128xbf16>, vector<1x128xf32> -> vector<1x128xf32>
    %c0_51 = arith.constant 0 : index
    %c0_52 = arith.constant 0 : index
    %89 = vector.load %arg19[%c0_51, %c0_52] : memref<1x1xf32, #tpu.memory_space<vmem>>, vector<1x1xf32>
    %90 = vector.broadcast %89 : vector<1x1xf32> to vector<1x128xf32>
    %91 = arith.addf %88, %90 : vector<1x128xf32>
    %c0_53 = arith.constant 0 : index
    %c0_54 = arith.constant 0 : index
    %92 = vector.load %arg20[%c0_53, %c0_54] : memref<1x128xf32, #tpu.memory_space<vmem>>, vector<1x128xf32>
    tpu.vector_store %arg20[%c0_53, %c0_54], %91 {strides = array<i32>} : memref<1x128xf32, #tpu.memory_space<vmem>>, vector<1x128xf32>,
    return
  }
  func.func @transform_0(%arg0: i32) -> (i32, i32) {
    %c0_i32 = arith.constant 0 : i32
    %c0_i32_0 = arith.constant 0 : i32
    return %arg0, %c0_i32 : i32, i32
  }
  func.func @transform_1(%arg0: i32) -> (i32, i32) {
    %c0_i32 = arith.constant 0 : i32
    %c0_i32_0 = arith.constant 0 : i32
    %c0_i32_1 = arith.constant 0 : i32
    return %c0_i32, %c0_i32_0 : i32, i32
  }
  func.func @transform_2(%arg0: i32) -> (i32, i32) {
    %c0_i32 = arith.constant 0 : i32
    %c0_i32_0 = arith.constant 0 : i32
    %c0_i32_1 = arith.constant 0 : i32
    return %c0_i32, %c0_i32_0 : i32, i32
  }
  func.func @transform_3(%arg0: i32) -> (i32, i32) {
    %c0_i32 = arith.constant 0 : i32
    %c0_i32_0 = arith.constant 0 : i32
    %c0_i32_1 = arith.constant 0 : i32
    return %c0_i32, %c0_i32_0 : i32, i32
  }
  func.func @transform_4(%arg0: i32) -> (i32, i32) {
    %c0_i32 = arith.constant 0 : i32
    %c0_i32_0 = arith.constant 0 : i32
    %c0_i32_1 = arith.constant 0 : i32
    return %c0_i32, %c0_i32_0 : i32, i32
  }
  func.func @transform_5(%arg0: i32) -> (i32, i32) {
    %c0_i32 = arith.constant 0 : i32
    %c0_i32_0 = arith.constant 0 : i32
    %c0_i32_1 = arith.constant 0 : i32
    return %c0_i32, %c0_i32_0 : i32, i32
  }
  func.func @transform_6(%arg0: i32) -> (i32, i32) {
    %c0_i32 = arith.constant 0 : i32
    %c0_i32_0 = arith.constant 0 : i32
    %c0_i32_1 = arith.constant 0 : i32
    return %c0_i32, %c0_i32_0 : i32, i32
  }
  func.func @transform_7(%arg0: i32) -> (i32, i32) {
    %c0_i32 = arith.constant 0 : i32
    %c0_i32_0 = arith.constant 0 : i32
    %c0_i32_1 = arith.constant 0 : i32
    return %c0_i32, %c0_i32_0 : i32, i32
  }
  func.func @transform_8(%arg0: i32) -> (i32, i32) {
    %c0_i32 = arith.constant 0 : i32
    %c0_i32_0 = arith.constant 0 : i32
    %c0_i32_1 = arith.constant 0 : i32
    return %c0_i32, %c0_i32_0 : i32, i32
  }
  func.func @transform_9(%arg0: i32) -> (i32, i32) {
    %c0_i32 = arith.constant 0 : i32
    %c0_i32_0 = arith.constant 0 : i32
    %c0_i32_1 = arith.constant 0 : i32
    return %c0_i32, %c0_i32_0 : i32, i32
  }
  func.func @transform_10(%arg0: i32) -> (i32, i32) {
    %c0_i32 = arith.constant 0 : i32
    %c0_i32_0 = arith.constant 0 : i32
    %c0_i32_1 = arith.constant 0 : i32
    return %c0_i32, %c0_i32_0 : i32, i32
  }
  func.func @transform_11(%arg0: i32) -> (i32, i32) {
    %c0_i32 = arith.constant 0 : i32
    %c0_i32_0 = arith.constant 0 : i32
    %c0_i32_1 = arith.constant 0 : i32
    return %c0_i32, %c0_i32_0 : i32, i32
  }
  func.func @transform_12(%arg0: i32) -> (i32, i32) {
    %c0_i32 = arith.constant 0 : i32
    %c0_i32_0 = arith.constant 0 : i32
    %c0_i32_1 = arith.constant 0 : i32
    return %c0_i32, %c0_i32_0 : i32, i32
  }
  func.func @transform_13(%arg0: i32) -> (i32, i32) {
    %c0_i32 = arith.constant 0 : i32
    %c0_i32_0 = arith.constant 0 : i32
    %c0_i32_1 = arith.constant 0 : i32
    return %c0_i32, %c0_i32_0 : i32, i32
  }
  func.func @transform_14(%arg0: i32) -> (i32, i32) {
    %c0_i32 = arith.constant 0 : i32
    %c0_i32_0 = arith.constant 0 : i32
    %c0_i32_1 = arith.constant 0 : i32
    return %c0_i32, %c0_i32_0 : i32, i32
  }
  func.func @transform_15(%arg0: i32) -> (i32, i32) {
    %c0_i32 = arith.constant 0 : i32
    %c0_i32_0 = arith.constant 0 : i32
    %c0_i32_1 = arith.constant 0 : i32
    return %c0_i32, %c0_i32_0 : i32, i32
  }
  func.func @transform_16(%arg0: i32) -> (i32, i32) {
    %c0_i32 = arith.constant 0 : i32
    %c0_i32_0 = arith.constant 0 : i32
    %c0_i32_1 = arith.constant 0 : i32
    return %c0_i32, %c0_i32_0 : i32, i32
  }
  func.func @transform_17(%arg0: i32) -> (i32, i32) {
    %c0_i32 = arith.constant 0 : i32
    %c0_i32_0 = arith.constant 0 : i32
    %c0_i32_1 = arith.constant 0 : i32
    return %c0_i32, %c0_i32_0 : i32, i32
  }
  func.func @transform_18(%arg0: i32) -> (i32, i32) {
    %c0_i32 = arith.constant 0 : i32
    %c0_i32_0 = arith.constant 0 : i32
    %c0_i32_1 = arith.constant 0 : i32
    return %c0_i32, %c0_i32_0 : i32, i32
  }
  func.func @transform_19(%arg0: i32) -> (i32, i32) {
    %c0_i32 = arith.constant 0 : i32
    %c0_i32_0 = arith.constant 0 : i32
    return %c0_i32, %arg0 : i32, i32
  }
}

</mosaic_0001>

<llo_original>
// kernel: tpu_custom_call.1
$region0: #{tpu_custom_call.1}
  #allocation0 [shape = 'u32[]', space=smem, size = 0x4, offset = 0x4, fixed_abs, tag = 'smem constant byte address 0x4 - core index']
  #allocation1 [shape = 'u32[72,128]{1,0:T(1,128)}', space=vmem, size = 0x9000, scoped, tag = 'internal scratch']
  #allocation2 [shape = 'f32[1,1]{1,0:T(1,128)S(1)}', space=vmem, size = 0x200, scoped, tag = 'scoped memory for tpu_custom_call.1']
  %s0 = inlined_call_operand.vmem [shape: f32[200,9], index: 0, kind: input, shape index: {}]
  %s1 = inlined_call_operand.vmem [shape: bf16[72,9], index: 1, kind: input, shape index: {}]
  %s2 = inlined_call_operand.vmem [shape: f32[72,1], index: 2, kind: input, shape index: {}]
  %s3 = inlined_call_operand.vmem [shape: bf16[72,72], index: 3, kind: input, shape index: {}]
  %s4 = inlined_call_operand.vmem [shape: f32[72,1], index: 4, kind: input, shape index: {}]
  %s5 = inlined_call_operand.vmem [shape: bf16[56,56], index: 5, kind: input, shape index: {}]
  %s6 = inlined_call_operand.vmem [shape: f32[56,1], index: 6, kind: input, shape index: {}]
  %s7 = inlined_call_operand.vmem [shape: bf16[112,56], index: 7, kind: input, shape index: {}]
  %s8 = inlined_call_operand.vmem [shape: f32[112,1], index: 8, kind: input, shape index: {}]
  %s9 = inlined_call_operand.vmem [shape: bf16[160,80], index: 9, kind: input, shape index: {}]
  %s10 = inlined_call_operand.vmem [shape: f32[160,1], index: 10, kind: input, shape index: {}]
  %s11 = inlined_call_operand.vmem [shape: bf16[320,160], index: 11, kind: input, shape index: {}]
  %s12 = inlined_call_operand.vmem [shape: f32[320,1], index: 12, kind: input, shape index: {}]
  %s13 = inlined_call_operand.vmem [shape: bf16[96,192], index: 13, kind: input, shape index: {}]
  %s14 = inlined_call_operand.vmem [shape: f32[96,1], index: 14, kind: input, shape index: {}]
  %s15 = inlined_call_operand.vmem [shape: bf16[48,96], index: 15, kind: input, shape index: {}]
  %s16 = inlined_call_operand.vmem [shape: f32[48,1], index: 16, kind: input, shape index: {}]
  %s17 = inlined_call_operand.vmem [shape: bf16[1,16], index: 17, kind: input, shape index: {}]
  %s18 = inlined_call_operand.<no memory space> [shape: f32[1,1], index: 18, kind: input, shape index: {}]
  %s19 = inlined_call_operand.hbm [shape: f32[1,256], index: 19, kind: output, shape index: {}]
  %s20 = sld [smem:[#allocation0]]
  $region109: #{tpu_custom_call.1} parent=0
    _
  %s22 = ssub.s32 1, %s20
  %s23 = scalar_select 0, %s22, %s20
  %v24 = vstv %s18
  %25 = vst [vmem:[#allocation2] sm:$0x1] %v24
  $region1: #{tpu_custom_call.1} parent=0
    #allocation3 [shape = 'u8[1024]{0}', space=vmem, size = 0x400, scoped, tag = 'output window, operand 0']
    #allocation4 [shape = 's32[2]{0}', space=sflag, size = 0x8, scoped, tag = 'scoped memory for tpu_custom_call.1']
    %26 = vsyncpa [#allocation4], 0
    %s27 = scalar_lea.sflag [#allocation4], 1
    %28 = vsyncpa %s27, 0
    loop: start=0, step=1, limit=4
    $region2: #{tpu_custom_call.1} parent=1 // loop_pre_header
      _
    $region3: #{tpu_custom_call.1} parent=1 // loop_header
      %s30 = sphi 0, %s34
      %p31 = scmp.ge.s32.totalorder %s30, 4
      %s40 = sphi 0, %s42
      %s43 = sphi 0, %s40
      %s44 = sphi 0, %s43
      %s60 = sphi 0, %s44
      %s64 = sphi 0, %s64
      %s66 = sphi 0, %s64
      %s67 = sphi 0, %s66
      %s81 = sphi 0, %s67
      %s85 = sphi 0, %s85
      %s87 = sphi 0, %s85
      %s88 = sphi 0, %s87
      %s102 = sphi 0, %s88
      %s106 = sphi 0, %s106
      %s108 = sphi 0, %s106
      %s109 = sphi 0, %s108
      %s123 = sphi 0, %s109
      %s127 = sphi 0, %s127
      %s129 = sphi 0, %s127
      %s130 = sphi 0, %s129
      %s144 = sphi 0, %s130
      %s148 = sphi 0, %s148
      %s150 = sphi 0, %s148
      %s151 = sphi 0, %s150
      %s165 = sphi 0, %s151
      %s169 = sphi 0, %s169
      %s171 = sphi 0, %s169
      %s172 = sphi 0, %s171
      %s186 = sphi 0, %s172
      %s190 = sphi 0, %s190
      %s192 = sphi 0, %s190
      %s193 = sphi 0, %s192
      %s207 = sphi 0, %s193
      %s211 = sphi 0, %s211
      %s213 = sphi 0, %s211
      %s214 = sphi 0, %s213
      %s228 = sphi 0, %s214
      %s232 = sphi 0, %s232
      %s234 = sphi 0, %s232
      %s235 = sphi 0, %s234
      %s249 = sphi 0, %s235
      %s253 = sphi 0, %s253
      %s255 = sphi 0, %s253
      %s256 = sphi 0, %s255
      %s270 = sphi 0, %s256
      %s274 = sphi 0, %s274
      %s276 = sphi 0, %s274
      %s277 = sphi 0, %s276
      %s291 = sphi 0, %s277
      %s295 = sphi 0, %s295
      %s297 = sphi 0, %s295
      %s298 = sphi 0, %s297
      %s312 = sphi 0, %s298
      %s316 = sphi 0, %s316
      %s318 = sphi 0, %s316
      %s319 = sphi 0, %s318
      %s333 = sphi 0, %s319
      %s337 = sphi 0, %s337
      %s339 = sphi 0, %s337
      %s340 = sphi 0, %s339
      %s354 = sphi 0, %s340
      %s358 = sphi 0, %s358
      %s360 = sphi 0, %s358
      %s361 = sphi 0, %s360
      %s375 = sphi 0, %s361
      %s379 = sphi 0, %s379
      %s381 = sphi 0, %s379
      %s382 = sphi 0, %s381
      %s396 = sphi 0, %s382
      %s400 = sphi 0, %s400
      %s402 = sphi 0, %s400
      %s403 = sphi 0, %s402
      %s417 = sphi 0, %s403
      %s421 = sphi 0, %s421
      %s423 = sphi 0, %s421
      %s424 = sphi 0, %s423
      %s438 = sphi 0, %s424
      %s444 = sphi 0, %s446
      %s447 = sphi 0, %s444
      %s448 = sphi 0, %s447
      %s464 = sphi 0, %s448
    $region4: #{tpu_custom_call.1} parent=1 // loop_header_branch
      %33 = sbr.rel (%p31) target = $region8
    $region5: #{tpu_custom_call.1} parent=1 // loop_body
      %s35 = ssub.s32 %s30, 1
      %s36 = ssub.s32 %s30, 2
      %s37 = sadd.s32 %s30, 1
      %s38 = ssub.s32 %s30, %s37
      %p39 = scmp.eq.s32.totalorder %s38, 0
      %s41 = sadd.s32 %s40, 1
      %s42 = scalar_select %p39, %s40, %s41
      %p45 = pneg %p39
      %p46 = scmp.eq.s32.totalorder %s30, 1
      %p47 = por %p45, %p46
      %p48 = scmp.ne.s32.totalorder %s40, %s43
      %p49 = scmp.eq.s32.totalorder %s30, 0
      %p50 = por %p48, %p49
      %p51 = scmp.ne.s32.totalorder %s40, %s43
      %p52 = scmp.eq.s32.totalorder %s35, 1
      %p53 = por %p51, %p52
      %p54 = scmp.ne.s32.totalorder %s43, %s44
      %p55 = scmp.eq.s32.totalorder %s35, 0
      %p56 = por %p54, %p55
      %p57 = scmp.ne.s32.totalorder %s43, %s44
      %p58 = scmp.eq.s32.totalorder %s36, 1
      %p59 = por %p57, %p58
      %p61 = scmp.ne.s32.totalorder %s44, %s60
      %p62 = scmp.eq.s32.totalorder %s36, 0
      %p63 = por %p61, %p62
      %s65 = sadd.s32 %s64, 1
      %p68 = scmp.eq.s32.totalorder %s30, 1
      %p69 = scmp.ne.s32.totalorder %s64, %s66
      %p70 = scmp.eq.s32.totalorder %s30, 0
      %p71 = por %p69, %p70
      %p72 = scmp.ne.s32.totalorder %s64, %s66
      %p73 = scmp.eq.s32.totalorder %s35, 1
      %p74 = por %p72, %p73
      %p75 = scmp.ne.s32.totalorder %s66, %s67
      %p76 = scmp.eq.s32.totalorder %s35, 0
      %p77 = por %p75, %p76
      %p78 = scmp.ne.s32.totalorder %s66, %s67
      %p79 = scmp.eq.s32.totalorder %s36, 1
      %p80 = por %p78, %p79
      %p82 = scmp.ne.s32.totalorder %s67, %s81
      %p83 = scmp.eq.s32.totalorder %s36, 0
      %p84 = por %p82, %p83
      %s86 = sadd.s32 %s85, 1
      %p89 = scmp.eq.s32.totalorder %s30, 1
      %p90 = scmp.ne.s32.totalorder %s85, %s87
      %p91 = scmp.eq.s32.totalorder %s30, 0
      %p92 = por %p90, %p91
      %p93 = scmp.ne.s32.totalorder %s85, %s87
      %p94 = scmp.eq.s32.totalorder %s35, 1
      %p95 = por %p93, %p94
      %p96 = scmp.ne.s32.totalorder %s87, %s88
      %p97 = scmp.eq.s32.totalorder %s35, 0
      %p98 = por %p96, %p97
      %p99 = scmp.ne.s32.totalorder %s87, %s88
      %p100 = scmp.eq.s32.totalorder %s36, 1
      %p101 = por %p99, %p100
      %p103 = scmp.ne.s32.totalorder %s88, %s102
      %p104 = scmp.eq.s32.totalorder %s36, 0
      %p105 = por %p103, %p104
      %s107 = sadd.s32 %s106, 1
      %p110 = scmp.eq.s32.totalorder %s30, 1
      %p111 = scmp.ne.s32.totalorder %s106, %s108
      %p112 = scmp.eq.s32.totalorder %s30, 0
      %p113 = por %p111, %p112
      %p114 = scmp.ne.s32.totalorder %s106, %s108
      %p115 = scmp.eq.s32.totalorder %s35, 1
      %p116 = por %p114, %p115
      %p117 = scmp.ne.s32.totalorder %s108, %s109
      %p118 = scmp.eq.s32.totalorder %s35, 0
      %p119 = por %p117, %p118
      %p120 = scmp.ne.s32.totalorder %s108, %s109
      %p121 = scmp.eq.s32.totalorder %s36, 1
      %p122 = por %p120, %p121
      %p124 = scmp.ne.s32.totalorder %s109, %s123
      %p125 = scmp.eq.s32.totalorder %s36, 0
      %p126 = por %p124, %p125
      %s128 = sadd.s32 %s127, 1
      %p131 = scmp.eq.s32.totalorder %s30, 1
      %p132 = scmp.ne.s32.totalorder %s127, %s129
      %p133 = scmp.eq.s32.totalorder %s30, 0
      %p134 = por %p132, %p133
      %p135 = scmp.ne.s32.totalorder %s127, %s129
      %p136 = scmp.eq.s32.totalorder %s35, 1
      %p137 = por %p135, %p136
      %p138 = scmp.ne.s32.totalorder %s129, %s130
      %p139 = scmp.eq.s32.totalorder %s35, 0
      %p140 = por %p138, %p139
      %p141 = scmp.ne.s32.totalorder %s129, %s130
      %p142 = scmp.eq.s32.totalorder %s36, 1
      %p143 = por %p141, %p142
      %p145 = scmp.ne.s32.totalorder %s130, %s144
      %p146 = scmp.eq.s32.totalorder %s36, 0
      %p147 = por %p145, %p146
      %s149 = sadd.s32 %s148, 1
      %p152 = scmp.eq.s32.totalorder %s30, 1
      %p153 = scmp.ne.s32.totalorder %s148, %s150
      %p154 = scmp.eq.s32.totalorder %s30, 0
      %p155 = por %p153, %p154
      %p156 = scmp.ne.s32.totalorder %s148, %s150
      %p157 = scmp.eq.s32.totalorder %s35, 1
      %p158 = por %p156, %p157
      %p159 = scmp.ne.s32.totalorder %s150, %s151
      %p160 = scmp.eq.s32.totalorder %s35, 0
      %p161 = por %p159, %p160
      %p162 = scmp.ne.s32.totalorder %s150, %s151
      %p163 = scmp.eq.s32.totalorder %s36, 1
      %p164 = por %p162, %p163
      %p166 = scmp.ne.s32.totalorder %s151, %s165
      %p167 = scmp.eq.s32.totalorder %s36, 0
      %p168 = por %p166, %p167
      %s170 = sadd.s32 %s169, 1
      %p173 = scmp.eq.s32.totalorder %s30, 1
      %p174 = scmp.ne.s32.totalorder %s169, %s171
      %p175 = scmp.eq.s32.totalorder %s30, 0
      %p176 = por %p174, %p175
      %p177 = scmp.ne.s32.totalorder %s169, %s171
      %p178 = scmp.eq.s32.totalorder %s35, 1
      %p179 = por %p177, %p178
      %p180 = scmp.ne.s32.totalorder %s171, %s172
      %p181 = scmp.eq.s32.totalorder %s35, 0
      %p182 = por %p180, %p181
      %p183 = scmp.ne.s32.totalorder %s171, %s172
      %p184 = scmp.eq.s32.totalorder %s36, 1
      %p185 = por %p183, %p184
      %p187 = scmp.ne.s32.totalorder %s172, %s186
      %p188 = scmp.eq.s32.totalorder %s36, 0
      %p189 = por %p187, %p188
      %s191 = sadd.s32 %s190, 1
      %p194 = scmp.eq.s32.totalorder %s30, 1
      %p195 = scmp.ne.s32.totalorder %s190, %s192
      %p196 = scmp.eq.s32.totalorder %s30, 0
      %p197 = por %p195, %p196
      %p198 = scmp.ne.s32.totalorder %s190, %s192
      %p199 = scmp.eq.s32.totalorder %s35, 1
      %p200 = por %p198, %p199
      %p201 = scmp.ne.s32.totalorder %s192, %s193
      %p202 = scmp.eq.s32.totalorder %s35, 0
      %p203 = por %p201, %p202
      %p204 = scmp.ne.s32.totalorder %s192, %s193
      %p205 = scmp.eq.s32.totalorder %s36, 1
      %p206 = por %p204, %p205
      %p208 = scmp.ne.s32.totalorder %s193, %s207
      %p209 = scmp.eq.s32.totalorder %s36, 0
      %p210 = por %p208, %p209
      %s212 = sadd.s32 %s211, 1
      %p215 = scmp.eq.s32.totalorder %s30, 1
      %p216 = scmp.ne.s32.totalorder %s211, %s213
      %p217 = scmp.eq.s32.totalorder %s30, 0
      %p218 = por %p216, %p217
      %p219 = scmp.ne.s32.totalorder %s211, %s213
      %p220 = scmp.eq.s32.totalorder %s35, 1
      %p221 = por %p219, %p220
      %p222 = scmp.ne.s32.totalorder %s213, %s214
      %p223 = scmp.eq.s32.totalorder %s35, 0
      %p224 = por %p222, %p223
      %p225 = scmp.ne.s32.totalorder %s213, %s214
      %p226 = scmp.eq.s32.totalorder %s36, 1
      %p227 = por %p225, %p226
      %p229 = scmp.ne.s32.totalorder %s214, %s228
      %p230 = scmp.eq.s32.totalorder %s36, 0
      %p231 = por %p229, %p230
      %s233 = sadd.s32 %s232, 1
      %p236 = scmp.eq.s32.totalorder %s30, 1
      %p237 = scmp.ne.s32.totalorder %s232, %s234
      %p238 = scmp.eq.s32.totalorder %s30, 0
      %p239 = por %p237, %p238
      %p240 = scmp.ne.s32.totalorder %s232, %s234
      %p241 = scmp.eq.s32.totalorder %s35, 1
      %p242 = por %p240, %p241
      %p243 = scmp.ne.s32.totalorder %s234, %s235
      %p244 = scmp.eq.s32.totalorder %s35, 0
      %p245 = por %p243, %p244
      %p246 = scmp.ne.s32.totalorder %s234, %s235
      %p247 = scmp.eq.s32.totalorder %s36, 1
      %p248 = por %p246, %p247
      %p250 = scmp.ne.s32.totalorder %s235, %s249
      %p251 = scmp.eq.s32.totalorder %s36, 0
      %p252 = por %p250, %p251
      %s254 = sadd.s32 %s253, 1
      %p257 = scmp.eq.s32.totalorder %s30, 1
      %p258 = scmp.ne.s32.totalorder %s253, %s255
      %p259 = scmp.eq.s32.totalorder %s30, 0
      %p260 = por %p258, %p259
      %p261 = scmp.ne.s32.totalorder %s253, %s255
      %p262 = scmp.eq.s32.totalorder %s35, 1
      %p263 = por %p261, %p262
      %p264 = scmp.ne.s32.totalorder %s255, %s256
      %p265 = scmp.eq.s32.totalorder %s35, 0
      %p266 = por %p264, %p265
      %p267 = scmp.ne.s32.totalorder %s255, %s256
      %p268 = scmp.eq.s32.totalorder %s36, 1
      %p269 = por %p267, %p268
      %p271 = scmp.ne.s32.totalorder %s256, %s270
      %p272 = scmp.eq.s32.totalorder %s36, 0
      %p273 = por %p271, %p272
      %s275 = sadd.s32 %s274, 1
      %p278 = scmp.eq.s32.totalorder %s30, 1
      %p279 = scmp.ne.s32.totalorder %s274, %s276
      %p280 = scmp.eq.s32.totalorder %s30, 0
      %p281 = por %p279, %p280
      %p282 = scmp.ne.s32.totalorder %s274, %s276
      %p283 = scmp.eq.s32.totalorder %s35, 1
      %p284 = por %p282, %p283
      %p285 = scmp.ne.s32.totalorder %s276, %s277
      %p286 = scmp.eq.s32.totalorder %s35, 0
      %p287 = por %p285, %p286
      %p288 = scmp.ne.s32.totalorder %s276, %s277
      %p289 = scmp.eq.s32.totalorder %s36, 1
      %p290 = por %p288, %p289
      %p292 = scmp.ne.s32.totalorder %s277, %s291
      %p293 = scmp.eq.s32.totalorder %s36, 0
      %p294 = por %p292, %p293
      %s296 = sadd.s32 %s295, 1
      %p299 = scmp.eq.s32.totalorder %s30, 1
      %p300 = scmp.ne.s32.totalorder %s295, %s297
      %p301 = scmp.eq.s32.totalorder %s30, 0
      %p302 = por %p300, %p301
      %p303 = scmp.ne.s32.totalorder %s295, %s297
      %p304 = scmp.eq.s32.totalorder %s35, 1
      %p305 = por %p303, %p304
      %p306 = scmp.ne.s32.totalorder %s297, %s298
      %p307 = scmp.eq.s32.totalorder %s35, 0
      %p308 = por %p306, %p307
      %p309 = scmp.ne.s32.totalorder %s297, %s298
      %p310 = scmp.eq.s32.totalorder %s36, 1
      %p311 = por %p309, %p310
      %p313 = scmp.ne.s32.totalorder %s298, %s312
      %p314 = scmp.eq.s32.totalorder %s36, 0
      %p315 = por %p313, %p314
      %s317 = sadd.s32 %s316, 1
      %p320 = scmp.eq.s32.totalorder %s30, 1
      %p321 = scmp.ne.s32.totalorder %s316, %s318
      %p322 = scmp.eq.s32.totalorder %s30, 0
      %p323 = por %p321, %p322
      %p324 = scmp.ne.s32.totalorder %s316, %s318
      %p325 = scmp.eq.s32.totalorder %s35, 1
      %p326 = por %p324, %p325
      %p327 = scmp.ne.s32.totalorder %s318, %s319
      %p328 = scmp.eq.s32.totalorder %s35, 0
      %p329 = por %p327, %p328
      %p330 = scmp.ne.s32.totalorder %s318, %s319
      %p331 = scmp.eq.s32.totalorder %s36, 1
      %p332 = por %p330, %p331
      %p334 = scmp.ne.s32.totalorder %s319, %s333
      %p335 = scmp.eq.s32.totalorder %s36, 0
      %p336 = por %p334, %p335
      %s338 = sadd.s32 %s337, 1
      %p341 = scmp.eq.s32.totalorder %s30, 1
      %p342 = scmp.ne.s32.totalorder %s337, %s339
      %p343 = scmp.eq.s32.totalorder %s30, 0
      %p344 = por %p342, %p343
      %p345 = scmp.ne.s32.totalorder %s337, %s339
      %p346 = scmp.eq.s32.totalorder %s35, 1
      %p347 = por %p345, %p346
      %p348 = scmp.ne.s32.totalorder %s339, %s340
      %p349 = scmp.eq.s32.totalorder %s35, 0
      %p350 = por %p348, %p349
      %p351 = scmp.ne.s32.totalorder %s339, %s340
      %p352 = scmp.eq.s32.totalorder %s36, 1
      %p353 = por %p351, %p352
      %p355 = scmp.ne.s32.totalorder %s340, %s354
      %p356 = scmp.eq.s32.totalorder %s36, 0
      %p357 = por %p355, %p356
      %s359 = sadd.s32 %s358, 1
      %p362 = scmp.eq.s32.totalorder %s30, 1
      %p363 = scmp.ne.s32.totalorder %s358, %s360
      %p364 = scmp.eq.s32.totalorder %s30, 0
      %p365 = por %p363, %p364
      %p366 = scmp.ne.s32.totalorder %s358, %s360
      %p367 = scmp.eq.s32.totalorder %s35, 1
      %p368 = por %p366, %p367
      %p369 = scmp.ne.s32.totalorder %s360, %s361
      %p370 = scmp.eq.s32.totalorder %s35, 0
      %p371 = por %p369, %p370
      %p372 = scmp.ne.s32.totalorder %s360, %s361
      %p373 = scmp.eq.s32.totalorder %s36, 1
      %p374 = por %p372, %p373
      %p376 = scmp.ne.s32.totalorder %s361, %s375
      %p377 = scmp.eq.s32.totalorder %s36, 0
      %p378 = por %p376, %p377
      %s380 = sadd.s32 %s379, 1
      %p383 = scmp.eq.s32.totalorder %s30, 1
      %p384 = scmp.ne.s32.totalorder %s379, %s381
      %p385 = scmp.eq.s32.totalorder %s30, 0
      %p386 = por %p384, %p385
      %p387 = scmp.ne.s32.totalorder %s379, %s381
      %p388 = scmp.eq.s32.totalorder %s35, 1
      %p389 = por %p387, %p388
      %p390 = scmp.ne.s32.totalorder %s381, %s382
      %p391 = scmp.eq.s32.totalorder %s35, 0
      %p392 = por %p390, %p391
      %p393 = scmp.ne.s32.totalorder %s381, %s382
      %p394 = scmp.eq.s32.totalorder %s36, 1
      %p395 = por %p393, %p394
      %p397 = scmp.ne.s32.totalorder %s382, %s396
      %p398 = scmp.eq.s32.totalorder %s36, 0
      %p399 = por %p397, %p398
      %s401 = sadd.s32 %s400, 1
      %p404 = scmp.eq.s32.totalorder %s30, 1
      %p405 = scmp.ne.s32.totalorder %s400, %s402
      %p406 = scmp.eq.s32.totalorder %s30, 0
      %p407 = por %p405, %p406
      %p408 = scmp.ne.s32.totalorder %s400, %s402
      %p409 = scmp.eq.s32.totalorder %s35, 1
      %p410 = por %p408, %p409
      %p411 = scmp.ne.s32.totalorder %s402, %s403
      %p412 = scmp.eq.s32.totalorder %s35, 0
      %p413 = por %p411, %p412
      %p414 = scmp.ne.s32.totalorder %s402, %s403
      %p415 = scmp.eq.s32.totalorder %s36, 1
      %p416 = por %p414, %p415
      %p418 = scmp.ne.s32.totalorder %s403, %s417
      %p419 = scmp.eq.s32.totalorder %s36, 0
      %p420 = por %p418, %p419
      %s422 = sadd.s32 %s421, 1
      %p425 = scmp.eq.s32.totalorder %s30, 1
      %p426 = scmp.ne.s32.totalorder %s421, %s423
      %p427 = scmp.eq.s32.totalorder %s30, 0
      %p428 = por %p426, %p427
      %p429 = scmp.ne.s32.totalorder %s421, %s423
      %p430 = scmp.eq.s32.totalorder %s35, 1
      %p431 = por %p429, %p430
      %p432 = scmp.ne.s32.totalorder %s423, %s424
      %p433 = scmp.eq.s32.totalorder %s35, 0
      %p434 = por %p432, %p433
      %p435 = scmp.ne.s32.totalorder %s423, %s424
      %p436 = scmp.eq.s32.totalorder %s36, 1
      %p437 = por %p435, %p436
      %p439 = scmp.ne.s32.totalorder %s424, %s438
      %p440 = scmp.eq.s32.totalorder %s36, 0
      %p441 = por %p439, %p440
      %s442 = ssub.s32 %s30, %s37
      %p443 = scmp.eq.s32.totalorder %s442, 0
      %s445 = sadd.s32 %s444, 1
      %s446 = scalar_select %p443, %s444, %s445
      %p449 = pneg %p443
      %p450 = scmp.eq.s32.totalorder %s30, 1
      %p451 = por %p449, %p450
      %p452 = scmp.ne.s32.totalorder %s444, %s447
      %p453 = scmp.eq.s32.totalorder %s30, 0
      %p454 = por %p452, %p453
      %p455 = scmp.ne.s32.totalorder %s444, %s447
      %p456 = scmp.eq.s32.totalorder %s35, 1
      %p457 = por %p455, %p456
      %p458 = scmp.ne.s32.totalorder %s447, %s448
      %p459 = scmp.eq.s32.totalorder %s35, 0
      %p460 = por %p458, %p459
      %p461 = scmp.ne.s32.totalorder %s447, %s448
      %p462 = scmp.eq.s32.totalorder %s36, 1
      %p463 = por %p461, %p462
      %p465 = scmp.ne.s32.totalorder %s448, %s464
      %p466 = scmp.eq.s32.totalorder %s36, 0
      %p467 = por %p465, %p466
      %p468 = scmp.le.s32.totalorder 1, %s30
      %p469 = scmp.lt.s32.totalorder %s30, 3
      %p470 = pnand %p468, %p469
      %p471 = pneg %p470
      // Predicated region
      $region9: #{tpu_custom_call.1} parent=5 // pred_check
        _
      $region10: #{tpu_custom_call.1} parent=5 // pred_check_branch
        %473 = sbr.rel (%p470) target = $region12
      $region11: #{tpu_custom_call.1} parent=5 // pred_region
        %s474 = ssub.s32 %s30, 1
        // Predicated region
        $region13: #{tpu_custom_call.1} parent=11 // pred_check
          %p475 = pneg %p77
        $region14: #{tpu_custom_call.1} parent=11 // pred_check_branch
          %477 = sbr.rel (%p475) target = $region16
        $region15: #{tpu_custom_call.1} parent=11 // pred_region
          _
        $region16: #{tpu_custom_call.1} parent=11 // pred_fallthru
          _
        // Predicated region
        $region17: #{tpu_custom_call.1} parent=11 // pred_check
          %p478 = pneg %p98
        $region18: #{tpu_custom_call.1} parent=11 // pred_check_branch
          %480 = sbr.rel (%p478) target = $region20
        $region19: #{tpu_custom_call.1} parent=11 // pred_region
          _
        $region20: #{tpu_custom_call.1} parent=11 // pred_fallthru
          _
        // Predicated region
        $region21: #{tpu_custom_call.1} parent=11 // pred_check
          %p481 = pneg %p119
        $region22: #{tpu_custom_call.1} parent=11 // pred_check_branch
          %483 = sbr.rel (%p481) target = $region24
        $region23: #{tpu_custom_call.1} parent=11 // pred_region
          _
        $region24: #{tpu_custom_call.1} parent=11 // pred_fallthru
          _
        // Predicated region
        $region25: #{tpu_custom_call.1} parent=11 // pred_check
          %p484 = pneg %p140
        $region26: #{tpu_custom_call.1} parent=11 // pred_check_branch
          %486 = sbr.rel (%p484) target = $region28
        $region27: #{tpu_custom_call.1} parent=11 // pred_region
          _
        $region28: #{tpu_custom_call.1} parent=11 // pred_fallthru
          _
        // Predicated region
        $region29: #{tpu_custom_call.1} parent=11 // pred_check
          %p487 = pneg %p161
        $region30: #{tpu_custom_call.1} parent=11 // pred_check_branch
          %489 = sbr.rel (%p487) target = $region32
        $region31: #{tpu_custom_call.1} parent=11 // pred_region
          _
        $region32: #{tpu_custom_call.1} parent=11 // pred_fallthru
          _
        // Predicated region
        $region33: #{tpu_custom_call.1} parent=11 // pred_check
          %p490 = pneg %p182
        $region34: #{tpu_custom_call.1} parent=11 // pred_check_branch
          %492 = sbr.rel (%p490) target = $region36
        $region35: #{tpu_custom_call.1} parent=11 // pred_region
          _
        $region36: #{tpu_custom_call.1} parent=11 // pred_fallthru
          _
        // Predicated region
        $region37: #{tpu_custom_call.1} parent=11 // pred_check
          %p493 = pneg %p203
        $region38: #{tpu_custom_call.1} parent=11 // pred_check_branch
          %495 = sbr.rel (%p493) target = $region40
        $region39: #{tpu_custom_call.1} parent=11 // pred_region
          _
        $region40: #{tpu_custom_call.1} parent=11 // pred_fallthru
          _
        // Predicated region
        $region41: #{tpu_custom_call.1} parent=11 // pred_check
          %p496 = pneg %p224
        $region42: #{tpu_custom_call.1} parent=11 // pred_check_branch
          %498 = sbr.rel (%p496) target = $region44
        $region43: #{tpu_custom_call.1} parent=11 // pred_region
          _
        $region44: #{tpu_custom_call.1} parent=11 // pred_fallthru
          _
        // Predicated region
        $region45: #{tpu_custom_call.1} parent=11 // pred_check
          %p499 = pneg %p245
        $region46: #{tpu_custom_call.1} parent=11 // pred_check_branch
          %501 = sbr.rel (%p499) target = $region48
        $region47: #{tpu_custom_call.1} parent=11 // pred_region
          _
        $region48: #{tpu_custom_call.1} parent=11 // pred_fallthru
          _
        // Predicated region
        $region49: #{tpu_custom_call.1} parent=11 // pred_check
          %p502 = pneg %p266
        $region50: #{tpu_custom_call.1} parent=11 // pred_check_branch
          %504 = sbr.rel (%p502) target = $region52
        $region51: #{tpu_custom_call.1} parent=11 // pred_region
          _
        $region52: #{tpu_custom_call.1} parent=11 // pred_fallthru
          _
        // Predicated region
        $region53: #{tpu_custom_call.1} parent=11 // pred_check
          %p505 = pneg %p287
        $region54: #{tpu_custom_call.1} parent=11 // pred_check_branch
          %507 = sbr.rel (%p505) target = $region56
        $region55: #{tpu_custom_call.1} parent=11 // pred_region
          _
        $region56: #{tpu_custom_call.1} parent=11 // pred_fallthru
          _
        // Predicated region
        $region57: #{tpu_custom_call.1} parent=11 // pred_check
          %p508 = pneg %p308
        $region58: #{tpu_custom_call.1} parent=11 // pred_check_branch
          %510 = sbr.rel (%p508) target = $region60
        $region59: #{tpu_custom_call.1} parent=11 // pred_region
          _
        $region60: #{tpu_custom_call.1} parent=11 // pred_fallthru
          _
        // Predicated region
        $region61: #{tpu_custom_call.1} parent=11 // pred_check
          %p511 = pneg %p329
        $region62: #{tpu_custom_call.1} parent=11 // pred_check_branch
          %513 = sbr.rel (%p511) target = $region64
        $region63: #{tpu_custom_call.1} parent=11 // pred_region
          _
        $region64: #{tpu_custom_call.1} parent=11 // pred_fallthru
          _
        // Predicated region
        $region65: #{tpu_custom_call.1} parent=11 // pred_check
          %p514 = pneg %p350
        $region66: #{tpu_custom_call.1} parent=11 // pred_check_branch
          %516 = sbr.rel (%p514) target = $region68
        $region67: #{tpu_custom_call.1} parent=11 // pred_region
          _
        $region68: #{tpu_custom_call.1} parent=11 // pred_fallthru
          _
        // Predicated region
        $region69: #{tpu_custom_call.1} parent=11 // pred_check
          %p517 = pneg %p371
        $region70: #{tpu_custom_call.1} parent=11 // pred_check_branch
          %519 = sbr.rel (%p517) target = $region72
        $region71: #{tpu_custom_call.1} parent=11 // pred_region
          _
        $region72: #{tpu_custom_call.1} parent=11 // pred_fallthru
          _
        // Predicated region
        $region73: #{tpu_custom_call.1} parent=11 // pred_check
          %p520 = pneg %p392
        $region74: #{tpu_custom_call.1} parent=11 // pred_check_branch
          %522 = sbr.rel (%p520) target = $region76
        $region75: #{tpu_custom_call.1} parent=11 // pred_region
          _
        $region76: #{tpu_custom_call.1} parent=11 // pred_fallthru
          _
        // Predicated region
        $region77: #{tpu_custom_call.1} parent=11 // pred_check
          %p523 = pneg %p413
        $region78: #{tpu_custom_call.1} parent=11 // pred_check_branch
          %525 = sbr.rel (%p523) target = $region80
        $region79: #{tpu_custom_call.1} parent=11 // pred_region
          _
        $region80: #{tpu_custom_call.1} parent=11 // pred_fallthru
          _
        // Predicated region
        $region81: #{tpu_custom_call.1} parent=11 // pred_check
          %p526 = pneg %p434
        $region82: #{tpu_custom_call.1} parent=11 // pred_check_branch
          %528 = sbr.rel (%p526) target = $region84
        $region83: #{tpu_custom_call.1} parent=11 // pred_region
          _
        $region84: #{tpu_custom_call.1} parent=11 // pred_fallthru
          _
      $region12: #{tpu_custom_call.1} parent=5 // pred_fallthru
        _
      %p529 = scmp.lt.s32.totalorder %s30, 2
      // Predicated region
      $region85: #{tpu_custom_call.1} parent=5 // pred_check
        %p530 = pneg %p529
      $region86: #{tpu_custom_call.1} parent=5 // pred_check_branch
        %532 = sbr.rel (%p530) target = $region88
      $region87: #{tpu_custom_call.1} parent=5 // pred_region
        // Predicated region
        $region89: #{tpu_custom_call.1} parent=87 // pred_check
          %p533 = pneg %p50
        $region90: #{tpu_custom_call.1} parent=87 // pred_check_branch
          %535 = sbr.rel (%p533) target = $region92
        $region91: #{tpu_custom_call.1} parent=87 // pred_region
          %s536 = smul.u32 16, %s30
          %s537 = ssub.s32 25, %s536
          %p538 = scmp.lt.s32.totalorder %s537, 16
          %s539 = scalar_select %p538, %s537, 16
          %s540 = smul.u32 8, %s539
          %p541 = scmp.lt.s32.totalorder %s536, 24
          %s542 = scalar_select %p541, %s536, 24
          %s543 = smul.addr %s542, 8
          %s544 = scalar_lea.vmem %s0, %s543
          %s545 = smul.u32 16, %s30
          %s546 = ssub.s32 25, %s545
          %p547 = scmp.lt.s32.totalorder %s546, 16
          %s548 = scalar_select %p547, %s546, 16
          %s549 = smul.u32 8, %s548
        $region92: #{tpu_custom_call.1} parent=87 // pred_fallthru
          _
      $region88: #{tpu_custom_call.1} parent=5 // pred_fallthru
        _
      %p550 = scmp.le.s32.totalorder 1, %s30
      %p551 = scmp.lt.s32.totalorder %s30, 3
      %p552 = pnand %p550, %p551
      %p553 = pneg %p552
      // Predicated region
      $region93: #{tpu_custom_call.1} parent=5 // pred_check
        _
      $region94: #{tpu_custom_call.1} parent=5 // pred_check_branch
        %555 = sbr.rel (%p552) target = $region96
      $region95: #{tpu_custom_call.1} parent=5 // pred_region
        %s556 = ssub.s32 %s30, 1
        %s557 = smul.u32 16, %s35
        %s558 = ssub.s32 25, %s557
        %p559 = scmp.lt.s32.totalorder %s558, 16
        %s560 = scalar_select %p559, %s558, 16
        %s561 = smul.u32 8, %s560
        %p562 = scmp.lt.s32.totalorder %s557, 24
        %s563 = scalar_select %p562, %s557, 24
        %s564 = smul.addr %s563, 8
        %s565 = scalar_lea.vmem %s0, %s564
        %p566 = pneg %p56
        %p567 = pneg %p53
        %p568 = pneg %p77
        %p569 = pneg %p74
        %p570 = pneg %p98
        %p571 = pneg %p95
        %p572 = pneg %p119
        %p573 = pneg %p116
        %p574 = pneg %p140
        %p575 = pneg %p137
        %p576 = pneg %p161
        %p577 = pneg %p158
        %p578 = pneg %p182
        %p579 = pneg %p179
        %p580 = pneg %p203
        %p581 = pneg %p200
        %p582 = pneg %p224
        %p583 = pneg %p221
        %p584 = pneg %p245
        %p585 = pneg %p242
        %p586 = pneg %p266
        %p587 = pneg %p263
        %p588 = pneg %p287
        %p589 = pneg %p284
        %p590 = pneg %p308
        %p591 = pneg %p305
        %p592 = pneg %p329
        %p593 = pneg %p326
        %p594 = pneg %p350
        %p595 = pneg %p347
        %p596 = pneg %p371
        %p597 = pneg %p368
        %p598 = pneg %p392
        %p599 = pneg %p389
        %p600 = pneg %p413
        %p601 = pneg %p410
        %p602 = pneg %p434
        %p603 = pneg %p431
        %p604 = pneg %p460
        %p605 = pneg %p457
        %s606 = sand.u32 %s447, 1
        %s607 = scalar_lea.sflag [#allocation4], %s606
        %s608 = sand.u32 %s447, 1
        %s609 = scalar_lea.vmem [#allocation3], %s608
        %s610 = smul.u32 16, %s35
        %s611 = ssub.s32 25, %s610
        %p612 = scmp.lt.s32.totalorder %s611, 16
        %s613 = scalar_select %p612, %s611, 16
        %s614 = smul.u32 8, %s613
        %p615 = scmp.lt.s32.totalorder %s610, 24
        %s616 = scalar_select %p615, %s610, 24
        %s617 = smul.addr %s616, 8
        %s618 = scalar_lea.vmem %s0, %s617
        %s619 = smul.u32 16, %s35
        %s620 = ssub.s32 25, %s619
        %p621 = scmp.lt.s32.totalorder %s620, 16
        %s622 = scalar_select %p621, %s620, 16
        %s623 = smul.u32 8, %s622
        %v625 = vld [vmem:[%s618] sm:$0xff]
        %v626 = vld [vmem:[%s618 + $0x8] sm:$0xff]
        %v627 = vld [vmem:[%s618 + $0x10] sm:$0xff]
        %v628 = vld [vmem:[%s618 + $0x18] sm:$0xff]
        %v629 = vld [vmem:[%s618 + $0x20] sm:$0xff]
        %v630 = vld [vmem:[%s618 + $0x28] sm:$0xff]
        %v631 = vld [vmem:[%s618 + $0x30] sm:$0xff]
        %v632 = vld [vmem:[%s618 + $0x38] sm:$0xff]
        %v633 = vld [vmem:[%s618 + $0x40] sm:$0xff]
        %v634 = vld [vmem:[%s618 + $0x48] sm:$0xff]
        %v635 = vld [vmem:[%s618 + $0x50] sm:$0xff]
        %v636 = vld [vmem:[%s618 + $0x58] sm:$0xff]
        %v637 = vld [vmem:[%s618 + $0x60] sm:$0xff]
        %v638 = vld [vmem:[%s618 + $0x68] sm:$0xff]
        %v639 = vld [vmem:[%s618 + $0x70] sm:$0xff]
        %v640 = vld [vmem:[%s618 + $0x78] sm:$0xff]
        %641 = vxpose.xlu0.b32.start [1/16] %v625, 128
        %642 = vxpose.xlu0.b32.cont [2/16] %v626, 128
        %643 = vxpose.xlu0.b32.cont [3/16] %v627, 128
        %644 = vxpose.xlu0.b32.cont [4/16] %v628, 128
        %645 = vxpose.xlu0.b32.cont [5/16] %v629, 128
        %646 = vxpose.xlu0.b32.cont [6/16] %v630, 128
        %647 = vxpose.xlu0.b32.cont [7/16] %v631, 128
        %648 = vxpose.xlu0.b32.cont [8/16] %v632, 128
        %649 = vxpose.xlu0.b32.cont [9/16] %v633, 128
        %650 = vxpose.xlu0.b32.cont [10/16] %v634, 128
        %651 = vxpose.xlu0.b32.cont [11/16] %v635, 128
        %652 = vxpose.xlu0.b32.cont [12/16] %v636, 128
        %653 = vxpose.xlu0.b32.cont [13/16] %v637, 128
        %654 = vxpose.xlu0.b32.cont [14/16] %v638, 128
        %655 = vxpose.xlu0.b32.cont [15/16] %v639, 128
        %656 = vxpose.xlu0.b32.end [16/16] %v640, 128
        %v657 = vpop.trf.xlu0
        %v658 = vpop.trf.xlu0
        %v659 = vpop.trf.xlu0
        %v660 = vpop.trf.xlu0
        %v661 = vpop.trf.xlu0
        %v662 = vpop.trf.xlu0
        %v663 = vpop.trf.xlu0
        %v664 = vpop.trf.xlu0
        %v665 = vpop.trf.xlu0
        %v666 = vpop.trf.xlu0
        %v667 = vpop.trf.xlu0
        %v668 = vpop.trf.xlu0
        %v669 = vpop.trf.xlu0
        %v670 = vpop.trf.xlu0
        %v671 = vpop.trf.xlu0
        %v672 = vpop.trf.xlu0
        %v673 = vld [vmem:[%s1] sm:$0xf]
        %v674 = vld [vmem:[%s1 + $0x4] sm:$0xf]
        %v675 = vld [vmem:[%s1 + $0x8] sm:$0xf]
        %v676 = vld [vmem:[%s1 + $0xc] sm:$0xf]
        %v677 = vld [vmem:[%s1 + $0x10] sm:$0xf]
        %v678 = vld [vmem:[%s1 + $0x14] sm:$0xf]
        %v679 = vld [vmem:[%s1 + $0x18] sm:$0xf]
        %v680 = vld [vmem:[%s1 + $0x1c] sm:$0xf]
        %v681 = vld [vmem:[%s1 + $0x20] sm:$0xf]
        %v682 = vpack.c.bf16 %v658, %v657
        %v683 = vld [vmem:[%s2] sm:$0xff]
        %v684 = vld [vmem:[%s2 + $0x8] sm:$0xff]
        %v685 = vld [vmem:[%s2 + $0x10] sm:$0xff]
        %v686 = vld [vmem:[%s2 + $0x18] sm:$0xff]
        %v687 = vld [vmem:[%s2 + $0x20] sm:$0xff]
        %v688 = vld [vmem:[%s2 + $0x28] sm:$0xff]
        %v689 = vld [vmem:[%s2 + $0x30] sm:$0xff]
        %v690 = vld [vmem:[%s2 + $0x38] sm:$0xff]
        %v691 = vld [vmem:[%s2 + $0x40] sm:$0xff]
        %693 = vset.pattern.permute.xlu0 0
        %694 = vperm.xlu0 %693, %v683
        %v695 = vpop.permute.xlu0 %694
        %698 = vset.pattern.permute.xlu0 0
        %699 = vperm.xlu0 %698, %v684
        %v700 = vpop.permute.xlu0 %699
        %703 = vset.pattern.permute.xlu0 0
        %704 = vperm.xlu0 %703, %v685
        %v705 = vpop.permute.xlu0 %704
        %708 = vset.pattern.permute.xlu0 0
        %709 = vperm.xlu0 %708, %v686
        %v710 = vpop.permute.xlu0 %709
        %713 = vset.pattern.permute.xlu0 0
        %714 = vperm.xlu0 %713, %v687
        %v715 = vpop.permute.xlu0 %714
        %718 = vset.pattern.permute.xlu0 0
        %719 = vperm.xlu0 %718, %v688
        %v720 = vpop.permute.xlu0 %719
        %723 = vset.pattern.permute.xlu0 0
        %724 = vperm.xlu0 %723, %v689
        %v725 = vpop.permute.xlu0 %724
        %728 = vset.pattern.permute.xlu0 0
        %729 = vperm.xlu0 %728, %v690
        %v730 = vpop.permute.xlu0 %729
        %733 = vset.pattern.permute.xlu0 0
        %734 = vperm.xlu0 %733, %v691
        %v735 = vpop.permute.xlu0 %734
        %v746 = vunpack.c.l.b16 %v673
        %v747 = vunpack.c.l.b16 %v674
        %v748 = vunpack.c.l.b16 %v675
        %v749 = vunpack.c.l.b16 %v676
        %v750 = vunpack.c.l.b16 %v677
        %v751 = vunpack.c.l.b16 %v678
        %v752 = vunpack.c.l.b16 %v679
        %v753 = vunpack.c.l.b16 %v680
        %v754 = vunpack.c.l.b16 %v681
        %v755 = vpack.c.b16 %v747, %v746
        %v756 = vpack.c.b16 %v749, %v748
        %v757 = vpack.c.b16 %v751, %v750
        %v758 = vpack.c.b16 %v753, %v752
        %v759 = vpack.c.b16 %v754, %v754
        %vm760 = vcmask 72704
        %v762 = vsel %vm760, %v755, 0
        %v765 = vsel %vm760, %v756, 0
        %v768 = vsel %vm760, %v757, 0
        %v771 = vsel %vm760, %v758, 0
        %v774 = vsel %vm760, %v759, 0
        %vm776 = vcmask 1043456
        %vm777 = vcmask 1044480
        %v778 = vsel %vm776, 4294967295, 65535
        %v779 = vsel %vm777, %v778, 0
        %v781 = vand.u32 %v682, %v779
        %783 = vmatpush.bf16.msra.mxu0 0
        %784 = vmatpush.bf16.msra.mxu0 0
        %785 = vmatpush.bf16.msra.mxu0 0
        %786 = vmatpush.bf16.msra.mxu0 0
        %787 = vmatpush.bf16.msra.mxu0 0
        %788 = vmatpush.bf16.msra.mxu0 0
        %789 = vmatpush.bf16.msra.mxu0 0
        %790 = vmatpush.bf16.msra.mxu0 %v781
        %791 = vmatmul.bf16.gmra.mxu0 %v762
        %v792 = vpop.f32.mrf.mxu0
        %v793 = vadd.f32 %v695, %v792
        %v794 = vpop.f32.mrf.mxu0
        %v795 = vadd.f32 %v700, %v794
        %796 = vmatmul.bf16.gmra.mxu0 %v765
        %v797 = vpop.f32.mrf.mxu0
        %v798 = vadd.f32 %v705, %v797
        %v799 = vpop.f32.mrf.mxu0
        %v800 = vadd.f32 %v710, %v799
        %801 = vmatmul.bf16.gmra.mxu0 %v768
        %v802 = vpop.f32.mrf.mxu0
        %v803 = vadd.f32 %v715, %v802
        %v804 = vpop.f32.mrf.mxu0
        %v805 = vadd.f32 %v720, %v804
        %806 = vmatmul.bf16.gmra.mxu0 %v771
        %v807 = vpop.f32.mrf.mxu0
        %v808 = vadd.f32 %v725, %v807
        %v809 = vpop.f32.mrf.mxu0
        %v810 = vadd.f32 %v730, %v809
        %811 = vmatmul.bf16.gmra.mxu0 %v774
        %v812 = vpop.f32.mrf.mxu0
        %v813 = vadd.f32 %v735, %v812
        %v814 = vpop.f32.mrf.mxu0
        %815 = vdwg.mxu0
        %v816 = vmax.f32 %v793, 0.0
        %v817 = vmax.f32 %v795, 0.0
        %v818 = vmax.f32 %v798, 0.0
        %v819 = vmax.f32 %v800, 0.0
        %v820 = vmax.f32 %v803, 0.0
        %v821 = vmax.f32 %v805, 0.0
        %v822 = vmax.f32 %v808, 0.0
        %v823 = vmax.f32 %v810, 0.0
        %v824 = vmax.f32 %v813, 0.0
        %v825 = vld [vmem:[%s3] sm:$0xf]
        %v826 = vld [vmem:[%s3 + $0x4] sm:$0xf]
        %v827 = vld [vmem:[%s3 + $0x8] sm:$0xf]
        %v828 = vld [vmem:[%s3 + $0xc] sm:$0xf]
        %v829 = vld [vmem:[%s3 + $0x10] sm:$0xf]
        %v830 = vld [vmem:[%s3 + $0x14] sm:$0xf]
        %v831 = vld [vmem:[%s3 + $0x18] sm:$0xf]
        %v832 = vld [vmem:[%s3 + $0x1c] sm:$0xf]
        %v833 = vld [vmem:[%s3 + $0x20] sm:$0xf]
        %v834 = vpack.c.bf16 %v817, %v816
        %v835 = vpack.c.bf16 %v819, %v818
        %v836 = vpack.c.bf16 %v821, %v820
        %v837 = vpack.c.bf16 %v823, %v822
        %v838 = vpack.c.bf16 %v824, %v824
        %v839 = vld [vmem:[%s4] sm:$0xff]
        %v840 = vld [vmem:[%s4 + $0x8] sm:$0xff]
        %v841 = vld [vmem:[%s4 + $0x10] sm:$0xff]
        %v842 = vld [vmem:[%s4 + $0x18] sm:$0xff]
        %v843 = vld [vmem:[%s4 + $0x20] sm:$0xff]
        %v844 = vld [vmem:[%s4 + $0x28] sm:$0xff]
        %v845 = vld [vmem:[%s4 + $0x30] sm:$0xff]
        %v846 = vld [vmem:[%s4 + $0x38] sm:$0xff]
        %v847 = vld [vmem:[%s4 + $0x40] sm:$0xff]
        %849 = vset.pattern.permute.xlu0 0
        %850 = vperm.xlu0 %849, %v839
        %v851 = vpop.permute.xlu0 %850
        %854 = vset.pattern.permute.xlu0 0
        %855 = vperm.xlu0 %854, %v840
        %v856 = vpop.permute.xlu0 %855
        %859 = vset.pattern.permute.xlu0 0
        %860 = vperm.xlu0 %859, %v841
        %v861 = vpop.permute.xlu0 %860
        %864 = vset.pattern.permute.xlu0 0
        %865 = vperm.xlu0 %864, %v842
        %v866 = vpop.permute.xlu0 %865
        %869 = vset.pattern.permute.xlu0 0
        %870 = vperm.xlu0 %869, %v843
        %v871 = vpop.permute.xlu0 %870
        %874 = vset.pattern.permute.xlu0 0
        %875 = vperm.xlu0 %874, %v844
        %v876 = vpop.permute.xlu0 %875
        %879 = vset.pattern.permute.xlu0 0
        %880 = vperm.xlu0 %879, %v845
        %v881 = vpop.permute.xlu0 %880
        %884 = vset.pattern.permute.xlu0 0
        %885 = vperm.xlu0 %884, %v846
        %v886 = vpop.permute.xlu0 %885
        %889 = vset.pattern.permute.xlu0 0
        %890 = vperm.xlu0 %889, %v847
        %v891 = vpop.permute.xlu0 %890
        %v902 = vunpack.c.l.b16 %v825
        %v903 = vunpack.c.l.b16 %v826
        %v904 = vunpack.c.l.b16 %v827
        %v905 = vunpack.c.l.b16 %v828
        %v906 = vunpack.c.l.b16 %v829
        %v907 = vunpack.c.l.b16 %v830
        %v908 = vunpack.c.l.b16 %v831
        %v909 = vunpack.c.l.b16 %v832
        %v910 = vunpack.c.l.b16 %v833
        %v911 = vpack.c.b16 %v903, %v902
        %v912 = vpack.c.b16 %v905, %v904
        %v913 = vpack.c.b16 %v907, %v906
        %v914 = vpack.c.b16 %v909, %v908
        %v915 = vpack.c.b16 %v910, %v910
        %vm916 = vcmask 588800
        %v918 = vsel %vm916, %v911, 0
        %v921 = vsel %vm916, %v912, 0
        %v924 = vsel %vm916, %v913, 0
        %v927 = vsel %vm916, %v914, 0
        %v930 = vsel %vm916, %v915, 0
        %v933 = vsel %vm776, %v838, 0
        %935 = vmatpush.bf16.msra.mxu0 0
        %936 = vmatpush.bf16.msra.mxu0 0
        %937 = vmatpush.bf16.msra.mxu0 0
        %938 = vmatpush.bf16.msra.mxu0 %v933
        %939 = vmatpush.bf16.msra.mxu0 %v837
        %940 = vmatpush.bf16.msra.mxu0 %v836
        %941 = vmatpush.bf16.msra.mxu0 %v835
        %942 = vmatpush.bf16.msra.mxu0 %v834
        %943 = vmatmul.bf16.gmra.mxu0 %v918
        %v944 = vpop.f32.mrf.mxu0
        %v945 = vadd.f32 %v851, %v944
        %v946 = vpop.f32.mrf.mxu0
        %v947 = vadd.f32 %v856, %v946
        %948 = vmatmul.bf16.gmra.mxu0 %v921
        %v949 = vpop.f32.mrf.mxu0
        %v950 = vadd.f32 %v861, %v949
        %v951 = vpop.f32.mrf.mxu0
        %v952 = vadd.f32 %v866, %v951
        %953 = vmatmul.bf16.gmra.mxu0 %v924
        %v954 = vpop.f32.mrf.mxu0
        %v955 = vadd.f32 %v871, %v954
        %v956 = vpop.f32.mrf.mxu0
        %v957 = vadd.f32 %v876, %v956
        %958 = vmatmul.bf16.gmra.mxu0 %v927
        %v959 = vpop.f32.mrf.mxu0
        %v960 = vadd.f32 %v881, %v959
        %v961 = vpop.f32.mrf.mxu0
        %v962 = vadd.f32 %v886, %v961
        %963 = vmatmul.bf16.gmra.mxu0 %v930
        %v964 = vpop.f32.mrf.mxu0
        %v965 = vadd.f32 %v891, %v964
        %v966 = vpop.f32.mrf.mxu0
        %967 = vdwg.mxu0
        %v968 = vmax.f32 %v945, 0.0
        %v969 = vmax.f32 %v947, 0.0
        %v970 = vmax.f32 %v950, 0.0
        %v971 = vmax.f32 %v952, 0.0
        %v972 = vmax.f32 %v955, 0.0
        %v973 = vmax.f32 %v957, 0.0
        %v974 = vmax.f32 %v960, 0.0
        %v975 = vmax.f32 %v962, 0.0
        %v976 = vmax.f32 %v965, 0.0
        %v977 = vmax.f32 %v968, %v969
        %v978 = vmax.f32 %v969, %v970
        %v979 = vmax.f32 %v970, %v971
        %v980 = vmax.f32 %v971, %v972
        %v981 = vmax.f32 %v972, %v973
        %v982 = vmax.f32 %v973, %v974
        %v983 = vmax.f32 %v974, %v975
        %v984 = vmax.f32 %v977, %v970
        %v985 = vmax.f32 %v978, %v971
        %v986 = vmax.f32 %v979, %v972
        %v987 = vmax.f32 %v980, %v973
        %v988 = vmax.f32 %v981, %v974
        %v989 = vmax.f32 %v982, %v975
        %v990 = vmax.f32 %v983, %v976
        %v991 = vld [vmem:[%s5] sm:$0xf]
        %v992 = vld [vmem:[%s5 + $0x4] sm:$0xf]
        %v993 = vld [vmem:[%s5 + $0x8] sm:$0xf]
        %v994 = vld [vmem:[%s5 + $0xc] sm:$0xf]
        %v995 = vld [vmem:[%s5 + $0x10] sm:$0xf]
        %v996 = vld [vmem:[%s5 + $0x14] sm:$0xf]
        %v997 = vld [vmem:[%s5 + $0x18] sm:$0xf]
        %v998 = vpack.c.bf16 %v985, %v984
        %v999 = vpack.c.bf16 %v987, %v986
        %v1000 = vpack.c.bf16 %v989, %v988
        %v1001 = vpack.c.bf16 %v990, %v990
        %v1002 = vld [vmem:[%s6] sm:$0xff]
        %v1003 = vld [vmem:[%s6 + $0x8] sm:$0xff]
        %v1004 = vld [vmem:[%s6 + $0x10] sm:$0xff]
        %v1005 = vld [vmem:[%s6 + $0x18] sm:$0xff]
        %v1006 = vld [vmem:[%s6 + $0x20] sm:$0xff]
        %v1007 = vld [vmem:[%s6 + $0x28] sm:$0xff]
        %v1008 = vld [vmem:[%s6 + $0x30] sm:$0xff]
        %1010 = vset.pattern.permute.xlu0 0
        %1011 = vperm.xlu0 %1010, %v1002
        %v1012 = vpop.permute.xlu0 %1011
        %1015 = vset.pattern.permute.xlu0 0
        %1016 = vperm.xlu0 %1015, %v1003
        %v1017 = vpop.permute.xlu0 %1016
        %1020 = vset.pattern.permute.xlu0 0
        %1021 = vperm.xlu0 %1020, %v1004
        %v1022 = vpop.permute.xlu0 %1021
        %1025 = vset.pattern.permute.xlu0 0
        %1026 = vperm.xlu0 %1025, %v1005
        %v1027 = vpop.permute.xlu0 %1026
        %1030 = vset.pattern.permute.xlu0 0
        %1031 = vperm.xlu0 %1030, %v1006
        %v1032 = vpop.permute.xlu0 %1031
        %1035 = vset.pattern.permute.xlu0 0
        %1036 = vperm.xlu0 %1035, %v1007
        %v1037 = vpop.permute.xlu0 %1036
        %1040 = vset.pattern.permute.xlu0 0
        %1041 = vperm.xlu0 %1040, %v1008
        %v1042 = vpop.permute.xlu0 %1041
        %v1051 = vunpack.c.l.b16 %v991
        %v1052 = vunpack.c.l.b16 %v992
        %v1053 = vunpack.c.l.b16 %v993
        %v1054 = vunpack.c.l.b16 %v994
        %v1055 = vunpack.c.l.b16 %v995
        %v1056 = vunpack.c.l.b16 %v996
        %v1057 = vunpack.c.l.b16 %v997
        %v1058 = vpack.c.b16 %v1052, %v1051
        %v1059 = vpack.c.b16 %v1054, %v1053
        %v1060 = vpack.c.b16 %v1056, %v1055
        %v1061 = vpack.c.b16 %v1057, %v1057
        %vm1062 = vcmask 457728
        %v1064 = vsel %vm1062, %v1058, 0
        %v1067 = vsel %vm1062, %v1059, 0
        %v1070 = vsel %vm1062, %v1060, 0
        %v1073 = vsel %vm1062, %v1061, 0
        %v1076 = vsel %vm776, %v1001, 0
        %1078 = vmatpush.bf16.msra.mxu0 0
        %1079 = vmatpush.bf16.msra.mxu0 0
        %1080 = vmatpush.bf16.msra.mxu0 0
        %1081 = vmatpush.bf16.msra.mxu0 0
        %1082 = vmatpush.bf16.msra.mxu0 %v1076
        %1083 = vmatpush.bf16.msra.mxu0 %v1000
        %1084 = vmatpush.bf16.msra.mxu0 %v999
        %1085 = vmatpush.bf16.msra.mxu0 %v998
        %1086 = vmatmul.bf16.gmra.mxu0 %v1064
        %v1087 = vpop.f32.mrf.mxu0
        %v1088 = vadd.f32 %v1012, %v1087
        %v1089 = vpop.f32.mrf.mxu0
        %v1090 = vadd.f32 %v1017, %v1089
        %1091 = vmatmul.bf16.gmra.mxu0 %v1067
        %v1092 = vpop.f32.mrf.mxu0
        %v1093 = vadd.f32 %v1022, %v1092
        %v1094 = vpop.f32.mrf.mxu0
        %v1095 = vadd.f32 %v1027, %v1094
        %1096 = vmatmul.bf16.gmra.mxu0 %v1070
        %v1097 = vpop.f32.mrf.mxu0
        %v1098 = vadd.f32 %v1032, %v1097
        %v1099 = vpop.f32.mrf.mxu0
        %v1100 = vadd.f32 %v1037, %v1099
        %1101 = vmatmul.bf16.gmra.mxu0 %v1073
        %v1102 = vpop.f32.mrf.mxu0
        %v1103 = vadd.f32 %v1042, %v1102
        %v1104 = vpop.f32.mrf.mxu0
        %1105 = vdwg.mxu0
        %v1106 = vmax.f32 %v1088, 0.0
        %v1107 = vmax.f32 %v1090, 0.0
        %v1108 = vmax.f32 %v1093, 0.0
        %v1109 = vmax.f32 %v1095, 0.0
        %v1110 = vmax.f32 %v1098, 0.0
        %v1111 = vmax.f32 %v1100, 0.0
        %v1112 = vmax.f32 %v1103, 0.0
        %v1113 = vld [vmem:[%s7] sm:$0xf]
        %v1114 = vld [vmem:[%s7 + $0x4] sm:$0xf]
        %v1115 = vld [vmem:[%s7 + $0x8] sm:$0xf]
        %v1116 = vld [vmem:[%s7 + $0xc] sm:$0xf]
        %v1117 = vld [vmem:[%s7 + $0x10] sm:$0xf]
        %v1118 = vld [vmem:[%s7 + $0x14] sm:$0xf]
        %v1119 = vld [vmem:[%s7 + $0x18] sm:$0xf]
        %v1120 = vld [vmem:[%s7 + $0x1c] sm:$0xf]
        %v1121 = vld [vmem:[%s7 + $0x20] sm:$0xf]
        %v1122 = vld [vmem:[%s7 + $0x24] sm:$0xf]
        %v1123 = vld [vmem:[%s7 + $0x28] sm:$0xf]
        %v1124 = vld [vmem:[%s7 + $0x2c] sm:$0xf]
        %v1125 = vld [vmem:[%s7 + $0x30] sm:$0xf]
        %v1126 = vld [vmem:[%s7 + $0x34] sm:$0xf]
        %v1127 = vpack.c.bf16 %v1107, %v1106
        %v1128 = vpack.c.bf16 %v1109, %v1108
        %v1129 = vpack.c.bf16 %v1111, %v1110
        %v1130 = vpack.c.bf16 %v1112, %v1112
        %v1131 = vld [vmem:[%s8] sm:$0xff]
        %v1132 = vld [vmem:[%s8 + $0x8] sm:$0xff]
        %v1133 = vld [vmem:[%s8 + $0x10] sm:$0xff]
        %v1134 = vld [vmem:[%s8 + $0x18] sm:$0xff]
        %v1135 = vld [vmem:[%s8 + $0x20] sm:$0xff]
        %v1136 = vld [vmem:[%s8 + $0x28] sm:$0xff]
        %v1137 = vld [vmem:[%s8 + $0x30] sm:$0xff]
        %v1138 = vld [vmem:[%s8 + $0x38] sm:$0xff]
        %v1139 = vld [vmem:[%s8 + $0x40] sm:$0xff]
        %v1140 = vld [vmem:[%s8 + $0x48] sm:$0xff]
        %v1141 = vld [vmem:[%s8 + $0x50] sm:$0xff]
        %v1142 = vld [vmem:[%s8 + $0x58] sm:$0xff]
        %v1143 = vld [vmem:[%s8 + $0x60] sm:$0xff]
        %v1144 = vld [vmem:[%s8 + $0x68] sm:$0xff]
        %1146 = vset.pattern.permute.xlu0 0
        %1147 = vperm.xlu0 %1146, %v1131
        %v1148 = vpop.permute.xlu0 %1147
        %1151 = vset.pattern.permute.xlu0 0
        %1152 = vperm.xlu0 %1151, %v1132
        %v1153 = vpop.permute.xlu0 %1152
        %1156 = vset.pattern.permute.xlu0 0
        %1157 = vperm.xlu0 %1156, %v1133
        %v1158 = vpop.permute.xlu0 %1157
        %1161 = vset.pattern.permute.xlu0 0
        %1162 = vperm.xlu0 %1161, %v1134
        %v1163 = vpop.permute.xlu0 %1162
        %1166 = vset.pattern.permute.xlu0 0
        %1167 = vperm.xlu0 %1166, %v1135
        %v1168 = vpop.permute.xlu0 %1167
        %1171 = vset.pattern.permute.xlu0 0
        %1172 = vperm.xlu0 %1171, %v1136
        %v1173 = vpop.permute.xlu0 %1172
        %1176 = vset.pattern.permute.xlu0 0
        %1177 = vperm.xlu0 %1176, %v1137
        %v1178 = vpop.permute.xlu0 %1177
        %1181 = vset.pattern.permute.xlu0 0
        %1182 = vperm.xlu0 %1181, %v1138
        %v1183 = vpop.permute.xlu0 %1182
        %1186 = vset.pattern.permute.xlu0 0
        %1187 = vperm.xlu0 %1186, %v1139
        %v1188 = vpop.permute.xlu0 %1187
        %1191 = vset.pattern.permute.xlu0 0
        %1192 = vperm.xlu0 %1191, %v1140
        %v1193 = vpop.permute.xlu0 %1192
        %1196 = vset.pattern.permute.xlu0 0
        %1197 = vperm.xlu0 %1196, %v1141
        %v1198 = vpop.permute.xlu0 %1197
        %1201 = vset.pattern.permute.xlu0 0
        %1202 = vperm.xlu0 %1201, %v1142
        %v1203 = vpop.permute.xlu0 %1202
        %1206 = vset.pattern.permute.xlu0 0
        %1207 = vperm.xlu0 %1206, %v1143
        %v1208 = vpop.permute.xlu0 %1207
        %1211 = vset.pattern.permute.xlu0 0
        %1212 = vperm.xlu0 %1211, %v1144
        %v1213 = vpop.permute.xlu0 %1212
        %v1229 = vunpack.c.l.b16 %v1113
        %v1230 = vunpack.c.l.b16 %v1114
        %v1231 = vunpack.c.l.b16 %v1115
        %v1232 = vunpack.c.l.b16 %v1116
        %v1233 = vunpack.c.l.b16 %v1117
        %v1234 = vunpack.c.l.b16 %v1118
        %v1235 = vunpack.c.l.b16 %v1119
        %v1236 = vunpack.c.l.b16 %v1120
        %v1237 = vunpack.c.l.b16 %v1121
        %v1238 = vunpack.c.l.b16 %v1122
        %v1239 = vunpack.c.l.b16 %v1123
        %v1240 = vunpack.c.l.b16 %v1124
        %v1241 = vunpack.c.l.b16 %v1125
        %v1242 = vunpack.c.l.b16 %v1126
        %v1243 = vpack.c.b16 %v1230, %v1229
        %v1244 = vpack.c.b16 %v1232, %v1231
        %v1245 = vpack.c.b16 %v1234, %v1233
        %v1246 = vpack.c.b16 %v1236, %v1235
        %v1247 = vpack.c.b16 %v1238, %v1237
        %v1248 = vpack.c.b16 %v1240, %v1239
        %v1249 = vpack.c.b16 %v1242, %v1241
        %v1251 = vsel %vm1062, %v1243, 0
        %v1254 = vsel %vm1062, %v1244, 0
        %v1257 = vsel %vm1062, %v1245, 0
        %v1260 = vsel %vm1062, %v1246, 0
        %v1263 = vsel %vm1062, %v1247, 0
        %v1266 = vsel %vm1062, %v1248, 0
        %v1269 = vsel %vm1062, %v1249, 0
        %v1272 = vsel %vm776, %v1130, 0
        %1274 = vmatpush.bf16.msra.mxu0 0
        %1275 = vmatpush.bf16.msra.mxu0 0
        %1276 = vmatpush.bf16.msra.mxu0 0
        %1277 = vmatpush.bf16.msra.mxu0 0
        %1278 = vmatpush.bf16.msra.mxu0 %v1272
        %1279 = vmatpush.bf16.msra.mxu0 %v1129
        %1280 = vmatpush.bf16.msra.mxu0 %v1128
        %1281 = vmatpush.bf16.msra.mxu0 %v1127
        %1282 = vmatmul.bf16.gmra.mxu0 %v1251
        %v1283 = vpop.f32.mrf.mxu0
        %v1284 = vadd.f32 %v1148, %v1283
        %v1285 = vpop.f32.mrf.mxu0
        %v1286 = vadd.f32 %v1153, %v1285
        %1287 = vmatmul.bf16.gmra.mxu0 %v1254
        %v1288 = vpop.f32.mrf.mxu0
        %v1289 = vadd.f32 %v1158, %v1288
        %v1290 = vpop.f32.mrf.mxu0
        %v1291 = vadd.f32 %v1163, %v1290
        %1292 = vmatmul.bf16.gmra.mxu0 %v1257
        %v1293 = vpop.f32.mrf.mxu0
        %v1294 = vadd.f32 %v1168, %v1293
        %v1295 = vpop.f32.mrf.mxu0
        %v1296 = vadd.f32 %v1173, %v1295
        %1297 = vmatmul.bf16.gmra.mxu0 %v1260
        %v1298 = vpop.f32.mrf.mxu0
        %v1299 = vadd.f32 %v1178, %v1298
        %v1300 = vpop.f32.mrf.mxu0
        %v1301 = vadd.f32 %v1183, %v1300
        %1302 = vmatmul.bf16.gmra.mxu0 %v1263
        %v1303 = vpop.f32.mrf.mxu0
        %v1304 = vadd.f32 %v1188, %v1303
        %v1305 = vpop.f32.mrf.mxu0
        %v1306 = vadd.f32 %v1193, %v1305
        %1307 = vmatmul.bf16.gmra.mxu0 %v1266
        %v1308 = vpop.f32.mrf.mxu0
        %v1309 = vadd.f32 %v1198, %v1308
        %v1310 = vpop.f32.mrf.mxu0
        %v1311 = vadd.f32 %v1203, %v1310
        %1312 = vmatmul.bf16.gmra.mxu0 %v1269
        %v1313 = vpop.f32.mrf.mxu0
        %v1314 = vadd.f32 %v1208, %v1313
        %v1315 = vpop.f32.mrf.mxu0
        %v1316 = vadd.f32 %v1213, %v1315
        %1317 = vdwg.mxu0
        %v1318 = vmax.f32 %v1284, 0.0
        %v1319 = vmax.f32 %v1286, 0.0
        %v1320 = vmax.f32 %v1289, 0.0
        %v1321 = vmax.f32 %v1291, 0.0
        %v1322 = vmax.f32 %v1294, 0.0
        %v1323 = vmax.f32 %v1296, 0.0
        %v1324 = vmax.f32 %v1299, 0.0
        %v1325 = vmax.f32 %v1301, 0.0
        %v1326 = vmax.f32 %v1304, 0.0
        %v1327 = vmax.f32 %v1306, 0.0
        %v1328 = vmax.f32 %v1309, 0.0
        %v1329 = vmax.f32 %v1311, 0.0
        %v1330 = vmax.f32 %v1314, 0.0
        %v1331 = vmax.f32 %v1316, 0.0
        %v1332 = vmax.f32 %v1318, %v1320
        %v1333 = vmax.f32 %v1319, %v1321
        %v1334 = vmax.f32 %v1320, %v1322
        %v1335 = vmax.f32 %v1321, %v1323
        %v1336 = vmax.f32 %v1322, %v1324
        %v1337 = vmax.f32 %v1323, %v1325
        %v1338 = vmax.f32 %v1324, %v1326
        %v1339 = vmax.f32 %v1325, %v1327
        %v1340 = vmax.f32 %v1326, %v1328
        %v1341 = vmax.f32 %v1327, %v1329
        %v1342 = vmax.f32 %v1332, %v1322
        %v1343 = vmax.f32 %v1333, %v1323
        %v1344 = vmax.f32 %v1334, %v1324
        %v1345 = vmax.f32 %v1335, %v1325
        %v1346 = vmax.f32 %v1336, %v1326
        %v1347 = vmax.f32 %v1337, %v1327
        %v1348 = vmax.f32 %v1338, %v1328
        %v1349 = vmax.f32 %v1339, %v1329
        %v1350 = vmax.f32 %v1340, %v1330
        %v1351 = vmax.f32 %v1341, %v1331
        %v1352 = vld [vmem:[%s9] sm:$0xf]
        %v1353 = vld [vmem:[%s9 + $0x4] sm:$0xf]
        %v1354 = vld [vmem:[%s9 + $0x8] sm:$0xf]
        %v1355 = vld [vmem:[%s9 + $0xc] sm:$0xf]
        %v1356 = vld [vmem:[%s9 + $0x10] sm:$0xf]
        %v1357 = vld [vmem:[%s9 + $0x14] sm:$0xf]
        %v1358 = vld [vmem:[%s9 + $0x18] sm:$0xf]
        %v1359 = vld [vmem:[%s9 + $0x1c] sm:$0xf]
        %v1360 = vld [vmem:[%s9 + $0x20] sm:$0xf]
        %v1361 = vld [vmem:[%s9 + $0x24] sm:$0xf]
        %v1362 = vld [vmem:[%s9 + $0x28] sm:$0xf]
        %v1363 = vld [vmem:[%s9 + $0x2c] sm:$0xf]
        %v1364 = vld [vmem:[%s9 + $0x30] sm:$0xf]
        %v1365 = vld [vmem:[%s9 + $0x34] sm:$0xf]
        %v1366 = vld [vmem:[%s9 + $0x38] sm:$0xf]
        %v1367 = vld [vmem:[%s9 + $0x3c] sm:$0xf]
        %v1368 = vld [vmem:[%s9 + $0x40] sm:$0xf]
        %v1369 = vld [vmem:[%s9 + $0x44] sm:$0xf]
        %v1370 = vld [vmem:[%s9 + $0x48] sm:$0xf]
        %v1371 = vld [vmem:[%s9 + $0x4c] sm:$0xf]
        %v1372 = vpack.c.bf16 %v1343, %v1342
        %v1373 = vpack.c.bf16 %v1345, %v1344
        %v1374 = vpack.c.bf16 %v1347, %v1346
        %v1375 = vpack.c.bf16 %v1349, %v1348
        %v1376 = vpack.c.bf16 %v1351, %v1350
        %v1377 = vld [vmem:[%s10] sm:$0xff]
        %v1378 = vld [vmem:[%s10 + $0x8] sm:$0xff]
        %v1379 = vld [vmem:[%s10 + $0x10] sm:$0xff]
        %v1380 = vld [vmem:[%s10 + $0x18] sm:$0xff]
        %v1381 = vld [vmem:[%s10 + $0x20] sm:$0xff]
        %v1382 = vld [vmem:[%s10 + $0x28] sm:$0xff]
        %v1383 = vld [vmem:[%s10 + $0x30] sm:$0xff]
        %v1384 = vld [vmem:[%s10 + $0x38] sm:$0xff]
        %v1385 = vld [vmem:[%s10 + $0x40] sm:$0xff]
        %v1386 = vld [vmem:[%s10 + $0x48] sm:$0xff]
        %v1387 = vld [vmem:[%s10 + $0x50] sm:$0xff]
        %v1388 = vld [vmem:[%s10 + $0x58] sm:$0xff]
        %v1389 = vld [vmem:[%s10 + $0x60] sm:$0xff]
        %v1390 = vld [vmem:[%s10 + $0x68] sm:$0xff]
        %v1391 = vld [vmem:[%s10 + $0x70] sm:$0xff]
        %v1392 = vld [vmem:[%s10 + $0x78] sm:$0xff]
        %v1393 = vld [vmem:[%s10 + $0x80] sm:$0xff]
        %v1394 = vld [vmem:[%s10 + $0x88] sm:$0xff]
        %v1395 = vld [vmem:[%s10 + $0x90] sm:$0xff]
        %v1396 = vld [vmem:[%s10 + $0x98] sm:$0xff]
        %1398 = vset.pattern.permute.xlu0 0
        %1399 = vperm.xlu0 %1398, %v1377
        %v1400 = vpop.permute.xlu0 %1399
        %1403 = vset.pattern.permute.xlu0 0
        %1404 = vperm.xlu0 %1403, %v1378
        %v1405 = vpop.permute.xlu0 %1404
        %1408 = vset.pattern.permute.xlu0 0
        %1409 = vperm.xlu0 %1408, %v1379
        %v1410 = vpop.permute.xlu0 %1409
        %1413 = vset.pattern.permute.xlu0 0
        %1414 = vperm.xlu0 %1413, %v1380
        %v1415 = vpop.permute.xlu0 %1414
        %1418 = vset.pattern.permute.xlu0 0
        %1419 = vperm.xlu0 %1418, %v1381
        %v1420 = vpop.permute.xlu0 %1419
        %1423 = vset.pattern.permute.xlu0 0
        %1424 = vperm.xlu0 %1423, %v1382
        %v1425 = vpop.permute.xlu0 %1424
        %1428 = vset.pattern.permute.xlu0 0
        %1429 = vperm.xlu0 %1428, %v1383
        %v1430 = vpop.permute.xlu0 %1429
        %1433 = vset.pattern.permute.xlu0 0
        %1434 = vperm.xlu0 %1433, %v1384
        %v1435 = vpop.permute.xlu0 %1434
        %1438 = vset.pattern.permute.xlu0 0
        %1439 = vperm.xlu0 %1438, %v1385
        %v1440 = vpop.permute.xlu0 %1439
        %1443 = vset.pattern.permute.xlu0 0
        %1444 = vperm.xlu0 %1443, %v1386
        %v1445 = vpop.permute.xlu0 %1444
        %1448 = vset.pattern.permute.xlu0 0
        %1449 = vperm.xlu0 %1448, %v1387
        %v1450 = vpop.permute.xlu0 %1449
        %1453 = vset.pattern.permute.xlu0 0
        %1454 = vperm.xlu0 %1453, %v1388
        %v1455 = vpop.permute.xlu0 %1454
        %1458 = vset.pattern.permute.xlu0 0
        %1459 = vperm.xlu0 %1458, %v1389
        %v1460 = vpop.permute.xlu0 %1459
        %1463 = vset.pattern.permute.xlu0 0
        %1464 = vperm.xlu0 %1463, %v1390
        %v1465 = vpop.permute.xlu0 %1464
        %1468 = vset.pattern.permute.xlu0 0
        %1469 = vperm.xlu0 %1468, %v1391
        %v1470 = vpop.permute.xlu0 %1469
        %1473 = vset.pattern.permute.xlu0 0
        %1474 = vperm.xlu0 %1473, %v1392
        %v1475 = vpop.permute.xlu0 %1474
        %1478 = vset.pattern.permute.xlu0 0
        %1479 = vperm.xlu0 %1478, %v1393
        %v1480 = vpop.permute.xlu0 %1479
        %1483 = vset.pattern.permute.xlu0 0
        %1484 = vperm.xlu0 %1483, %v1394
        %v1485 = vpop.permute.xlu0 %1484
        %1488 = vset.pattern.permute.xlu0 0
        %1489 = vperm.xlu0 %1488, %v1395
        %v1490 = vpop.permute.xlu0 %1489
        %1493 = vset.pattern.permute.xlu0 0
        %1494 = vperm.xlu0 %1493, %v1396
        %v1495 = vpop.permute.xlu0 %1494
        %v1517 = vunpack.c.l.b16 %v1352
        %v1518 = vunpack.c.l.b16 %v1353
        %v1519 = vunpack.c.l.b16 %v1354
        %v1520 = vunpack.c.l.b16 %v1355
        %v1521 = vunpack.c.l.b16 %v1356
        %v1522 = vunpack.c.l.b16 %v1357
        %v1523 = vunpack.c.l.b16 %v1358
        %v1524 = vunpack.c.l.b16 %v1359
        %v1525 = vunpack.c.l.b16 %v1360
        %v1526 = vunpack.c.l.b16 %v1361
        %v1527 = vunpack.c.l.b16 %v1362
        %v1528 = vunpack.c.l.b16 %v1363
        %v1529 = vunpack.c.l.b16 %v1364
        %v1530 = vunpack.c.l.b16 %v1365
        %v1531 = vunpack.c.l.b16 %v1366
        %v1532 = vunpack.c.l.b16 %v1367
        %v1533 = vunpack.c.l.b16 %v1368
        %v1534 = vunpack.c.l.b16 %v1369
        %v1535 = vunpack.c.l.b16 %v1370
        %v1536 = vunpack.c.l.b16 %v1371
        %v1537 = vpack.c.b16 %v1518, %v1517
        %v1538 = vpack.c.b16 %v1520, %v1519
        %v1539 = vpack.c.b16 %v1522, %v1521
        %v1540 = vpack.c.b16 %v1524, %v1523
        %v1541 = vpack.c.b16 %v1526, %v1525
        %v1542 = vpack.c.b16 %v1528, %v1527
        %v1543 = vpack.c.b16 %v1530, %v1529
        %v1544 = vpack.c.b16 %v1532, %v1531
        %v1545 = vpack.c.b16 %v1534, %v1533
        %v1546 = vpack.c.b16 %v1536, %v1535
        %vm1547 = vcmask 654336
        %v1549 = vsel %vm1547, %v1537, 0
        %v1552 = vsel %vm1547, %v1538, 0
        %v1555 = vsel %vm1547, %v1539, 0
        %v1558 = vsel %vm1547, %v1540, 0
        %v1561 = vsel %vm1547, %v1541, 0
        %v1564 = vsel %vm1547, %v1542, 0
        %v1567 = vsel %vm1547, %v1543, 0
        %v1570 = vsel %vm1547, %v1544, 0
        %v1573 = vsel %vm1547, %v1545, 0
        %v1576 = vsel %vm1547, %v1546, 0
        %1578 = vmatpush.bf16.msra.mxu0 0
        %1579 = vmatpush.bf16.msra.mxu0 0
        %1580 = vmatpush.bf16.msra.mxu0 0
        %1581 = vmatpush.bf16.msra.mxu0 %v1376
        %1582 = vmatpush.bf16.msra.mxu0 %v1375
        %1583 = vmatpush.bf16.msra.mxu0 %v1374
        %1584 = vmatpush.bf16.msra.mxu0 %v1373
        %1585 = vmatpush.bf16.msra.mxu0 %v1372
        %1586 = vmatmul.bf16.gmra.mxu0 %v1549
        %v1587 = vpop.f32.mrf.mxu0
        %v1588 = vadd.f32 %v1400, %v1587
        %v1589 = vpop.f32.mrf.mxu0
        %v1590 = vadd.f32 %v1405, %v1589
        %1591 = vmatmul.bf16.gmra.mxu0 %v1552
        %v1592 = vpop.f32.mrf.mxu0
        %v1593 = vadd.f32 %v1410, %v1592
        %v1594 = vpop.f32.mrf.mxu0
        %v1595 = vadd.f32 %v1415, %v1594
        %1596 = vmatmul.bf16.gmra.mxu0 %v1555
        %v1597 = vpop.f32.mrf.mxu0
        %v1598 = vadd.f32 %v1420, %v1597
        %v1599 = vpop.f32.mrf.mxu0
        %v1600 = vadd.f32 %v1425, %v1599
        %1601 = vmatmul.bf16.gmra.mxu0 %v1558
        %v1602 = vpop.f32.mrf.mxu0
        %v1603 = vadd.f32 %v1430, %v1602
        %v1604 = vpop.f32.mrf.mxu0
        %v1605 = vadd.f32 %v1435, %v1604
        %1606 = vmatmul.bf16.gmra.mxu0 %v1561
        %v1607 = vpop.f32.mrf.mxu0
        %v1608 = vadd.f32 %v1440, %v1607
        %v1609 = vpop.f32.mrf.mxu0
        %v1610 = vadd.f32 %v1445, %v1609
        %1611 = vmatmul.bf16.gmra.mxu0 %v1564
        %v1612 = vpop.f32.mrf.mxu0
        %v1613 = vadd.f32 %v1450, %v1612
        %v1614 = vpop.f32.mrf.mxu0
        %v1615 = vadd.f32 %v1455, %v1614
        %1616 = vmatmul.bf16.gmra.mxu0 %v1567
        %v1617 = vpop.f32.mrf.mxu0
        %v1618 = vadd.f32 %v1460, %v1617
        %v1619 = vpop.f32.mrf.mxu0
        %v1620 = vadd.f32 %v1465, %v1619
        %1621 = vmatmul.bf16.gmra.mxu0 %v1570
        %v1622 = vpop.f32.mrf.mxu0
        %v1623 = vadd.f32 %v1470, %v1622
        %v1624 = vpop.f32.mrf.mxu0
        %v1625 = vadd.f32 %v1475, %v1624
        %1626 = vmatmul.bf16.gmra.mxu0 %v1573
        %v1627 = vpop.f32.mrf.mxu0
        %v1628 = vadd.f32 %v1480, %v1627
        %v1629 = vpop.f32.mrf.mxu0
        %v1630 = vadd.f32 %v1485, %v1629
        %1631 = vmatmul.bf16.gmra.mxu0 %v1576
        %v1632 = vpop.f32.mrf.mxu0
        %v1633 = vadd.f32 %v1490, %v1632
        %v1634 = vpop.f32.mrf.mxu0
        %v1635 = vadd.f32 %v1495, %v1634
        %1636 = vdwg.mxu0
        %v1637 = vmax.f32 %v1588, 0.0
        %v1638 = vmax.f32 %v1590, 0.0
        %v1639 = vmax.f32 %v1593, 0.0
        %v1640 = vmax.f32 %v1595, 0.0
        %v1641 = vmax.f32 %v1598, 0.0
        %v1642 = vmax.f32 %v1600, 0.0
        %v1643 = vmax.f32 %v1603, 0.0
        %v1644 = vmax.f32 %v1605, 0.0
        %v1645 = vmax.f32 %v1608, 0.0
        %v1646 = vmax.f32 %v1610, 0.0
        %v1647 = vmax.f32 %v1613, 0.0
        %v1648 = vmax.f32 %v1615, 0.0
        %v1649 = vmax.f32 %v1618, 0.0
        %v1650 = vmax.f32 %v1620, 0.0
        %v1651 = vmax.f32 %v1623, 0.0
        %v1652 = vmax.f32 %v1625, 0.0
        %v1653 = vmax.f32 %v1628, 0.0
        %v1654 = vmax.f32 %v1630, 0.0
        %v1655 = vmax.f32 %v1633, 0.0
        %v1656 = vmax.f32 %v1635, 0.0
        %v1657 = vld [vmem:[%s11] sm:$0xff]
        %v1658 = vld [vmem:[%s11 + $0x8] sm:$0xff]
        %v1659 = vld [vmem:[%s11 + $0x10] sm:$0xff]
        %v1660 = vld [vmem:[%s11 + $0x18] sm:$0xff]
        %v1661 = vld [vmem:[%s11 + $0x20] sm:$0xff]
        %v1662 = vld [vmem:[%s11 + $0x28] sm:$0xff]
        %v1663 = vld [vmem:[%s11 + $0x30] sm:$0xff]
        %v1664 = vld [vmem:[%s11 + $0x38] sm:$0xff]
        %v1665 = vld [vmem:[%s11 + $0x40] sm:$0xff]
        %v1666 = vld [vmem:[%s11 + $0x48] sm:$0xff]
        %v1667 = vld [vmem:[%s11 + $0x50] sm:$0xff]
        %v1668 = vld [vmem:[%s11 + $0x58] sm:$0xff]
        %v1669 = vld [vmem:[%s11 + $0x60] sm:$0xff]
        %v1670 = vld [vmem:[%s11 + $0x68] sm:$0xff]
        %v1671 = vld [vmem:[%s11 + $0x70] sm:$0xff]
        %v1672 = vld [vmem:[%s11 + $0x78] sm:$0xff]
        %v1673 = vld [vmem:[%s11 + $0x80] sm:$0xff]
        %v1674 = vld [vmem:[%s11 + $0x88] sm:$0xff]
        %v1675 = vld [vmem:[%s11 + $0x90] sm:$0xff]
        %v1676 = vld [vmem:[%s11 + $0x98] sm:$0xff]
        %v1677 = vld [vmem:[%s11 + $0xa0] sm:$0xff]
        %v1678 = vld [vmem:[%s11 + $0xa8] sm:$0xff]
        %v1679 = vld [vmem:[%s11 + $0xb0] sm:$0xff]
        %v1680 = vld [vmem:[%s11 + $0xb8] sm:$0xff]
        %v1681 = vld [vmem:[%s11 + $0xc0] sm:$0xff]
        %v1682 = vld [vmem:[%s11 + $0xc8] sm:$0xff]
        %v1683 = vld [vmem:[%s11 + $0xd0] sm:$0xff]
        %v1684 = vld [vmem:[%s11 + $0xd8] sm:$0xff]
        %v1685 = vld [vmem:[%s11 + $0xe0] sm:$0xff]
        %v1686 = vld [vmem:[%s11 + $0xe8] sm:$0xff]
        %v1687 = vld [vmem:[%s11 + $0xf0] sm:$0xff]
        %v1688 = vld [vmem:[%s11 + $0xf8] sm:$0xff]
        %v1689 = vld [vmem:[%s11 + $0x100] sm:$0xff]
        %v1690 = vld [vmem:[%s11 + $0x108] sm:$0xff]
        %v1691 = vld [vmem:[%s11 + $0x110] sm:$0xff]
        %v1692 = vld [vmem:[%s11 + $0x118] sm:$0xff]
        %v1693 = vld [vmem:[%s11 + $0x120] sm:$0xff]
        %v1694 = vld [vmem:[%s11 + $0x128] sm:$0xff]
        %v1695 = vld [vmem:[%s11 + $0x130] sm:$0xff]
        %v1696 = vld [vmem:[%s11 + $0x138] sm:$0xff]
        %v1697 = vpack.c.bf16 %v1638, %v1637
        %v1698 = vpack.c.bf16 %v1640, %v1639
        %v1699 = vpack.c.bf16 %v1642, %v1641
        %v1700 = vpack.c.bf16 %v1644, %v1643
        %v1701 = vpack.c.bf16 %v1646, %v1645
        %v1702 = vpack.c.bf16 %v1648, %v1647
        %v1703 = vpack.c.bf16 %v1650, %v1649
        %v1704 = vpack.c.bf16 %v1652, %v1651
        %v1705 = vpack.c.bf16 %v1654, %v1653
        %v1706 = vpack.c.bf16 %v1656, %v1655
        %v1707 = vld [vmem:[%s12] sm:$0xff]
        %v1708 = vld [vmem:[%s12 + $0x8] sm:$0xff]
        %v1709 = vld [vmem:[%s12 + $0x10] sm:$0xff]
        %v1710 = vld [vmem:[%s12 + $0x18] sm:$0xff]
        %v1711 = vld [vmem:[%s12 + $0x20] sm:$0xff]
        %v1712 = vld [vmem:[%s12 + $0x28] sm:$0xff]
        %v1713 = vld [vmem:[%s12 + $0x30] sm:$0xff]
        %v1714 = vld [vmem:[%s12 + $0x38] sm:$0xff]
        %v1715 = vld [vmem:[%s12 + $0x40] sm:$0xff]
        %v1716 = vld [vmem:[%s12 + $0x48] sm:$0xff]
        %v1717 = vld [vmem:[%s12 + $0x50] sm:$0xff]
        %v1718 = vld [vmem:[%s12 + $0x58] sm:$0xff]
        %v1719 = vld [vmem:[%s12 + $0x60] sm:$0xff]
        %v1720 = vld [vmem:[%s12 + $0x68] sm:$0xff]
        %v1721 = vld [vmem:[%s12 + $0x70] sm:$0xff]
        %v1722 = vld [vmem:[%s12 + $0x78] sm:$0xff]
        %v1723 = vld [vmem:[%s12 + $0x80] sm:$0xff]
        %v1724 = vld [vmem:[%s12 + $0x88] sm:$0xff]
        %v1725 = vld [vmem:[%s12 + $0x90] sm:$0xff]
        %v1726 = vld [vmem:[%s12 + $0x98] sm:$0xff]
        %v1727 = vld [vmem:[%s12 + $0xa0] sm:$0xff]
        %v1728 = vld [vmem:[%s12 + $0xa8] sm:$0xff]
        %v1729 = vld [vmem:[%s12 + $0xb0] sm:$0xff]
        %v1730 = vld [vmem:[%s12 + $0xb8] sm:$0xff]
        %v1731 = vld [vmem:[%s12 + $0xc0] sm:$0xff]
        %v1732 = vld [vmem:[%s12 + $0xc8] sm:$0xff]
        %v1733 = vld [vmem:[%s12 + $0xd0] sm:$0xff]
        %v1734 = vld [vmem:[%s12 + $0xd8] sm:$0xff]
        %v1735 = vld [vmem:[%s12 + $0xe0] sm:$0xff]
        %v1736 = vld [vmem:[%s12 + $0xe8] sm:$0xff]
        %v1737 = vld [vmem:[%s12 + $0xf0] sm:$0xff]
        %v1738 = vld [vmem:[%s12 + $0xf8] sm:$0xff]
        %v1739 = vld [vmem:[%s12 + $0x100] sm:$0xff]
        %v1740 = vld [vmem:[%s12 + $0x108] sm:$0xff]
        %v1741 = vld [vmem:[%s12 + $0x110] sm:$0xff]
        %v1742 = vld [vmem:[%s12 + $0x118] sm:$0xff]
        %v1743 = vld [vmem:[%s12 + $0x120] sm:$0xff]
        %v1744 = vld [vmem:[%s12 + $0x128] sm:$0xff]
        %v1745 = vld [vmem:[%s12 + $0x130] sm:$0xff]
        %v1746 = vld [vmem:[%s12 + $0x138] sm:$0xff]
        %1748 = vset.pattern.permute.xlu0 0
        %1749 = vperm.xlu0 %1748, %v1707
        %v1750 = vpop.permute.xlu0 %1749
        %1753 = vset.pattern.permute.xlu0 0
        %1754 = vperm.xlu0 %1753, %v1708
        %v1755 = vpop.permute.xlu0 %1754
        %1758 = vset.pattern.permute.xlu0 0
        %1759 = vperm.xlu0 %1758, %v1709
        %v1760 = vpop.permute.xlu0 %1759
        %1763 = vset.pattern.permute.xlu0 0
        %1764 = vperm.xlu0 %1763, %v1710
        %v1765 = vpop.permute.xlu0 %1764
        %1768 = vset.pattern.permute.xlu0 0
        %1769 = vperm.xlu0 %1768, %v1711
        %v1770 = vpop.permute.xlu0 %1769
        %1773 = vset.pattern.permute.xlu0 0
        %1774 = vperm.xlu0 %1773, %v1712
        %v1775 = vpop.permute.xlu0 %1774
        %1778 = vset.pattern.permute.xlu0 0
        %1779 = vperm.xlu0 %1778, %v1713
        %v1780 = vpop.permute.xlu0 %1779
        %1783 = vset.pattern.permute.xlu0 0
        %1784 = vperm.xlu0 %1783, %v1714
        %v1785 = vpop.permute.xlu0 %1784
        %1788 = vset.pattern.permute.xlu0 0
        %1789 = vperm.xlu0 %1788, %v1715
        %v1790 = vpop.permute.xlu0 %1789
        %1793 = vset.pattern.permute.xlu0 0
        %1794 = vperm.xlu0 %1793, %v1716
        %v1795 = vpop.permute.xlu0 %1794
        %1798 = vset.pattern.permute.xlu0 0
        %1799 = vperm.xlu0 %1798, %v1717
        %v1800 = vpop.permute.xlu0 %1799
        %1803 = vset.pattern.permute.xlu0 0
        %1804 = vperm.xlu0 %1803, %v1718
        %v1805 = vpop.permute.xlu0 %1804
        %1808 = vset.pattern.permute.xlu0 0
        %1809 = vperm.xlu0 %1808, %v1719
        %v1810 = vpop.permute.xlu0 %1809
        %1813 = vset.pattern.permute.xlu0 0
        %1814 = vperm.xlu0 %1813, %v1720
        %v1815 = vpop.permute.xlu0 %1814
        %1818 = vset.pattern.permute.xlu0 0
        %1819 = vperm.xlu0 %1818, %v1721
        %v1820 = vpop.permute.xlu0 %1819
        %1823 = vset.pattern.permute.xlu0 0
        %1824 = vperm.xlu0 %1823, %v1722
        %v1825 = vpop.permute.xlu0 %1824
        %1828 = vset.pattern.permute.xlu0 0
        %1829 = vperm.xlu0 %1828, %v1723
        %v1830 = vpop.permute.xlu0 %1829
        %1833 = vset.pattern.permute.xlu0 0
        %1834 = vperm.xlu0 %1833, %v1724
        %v1835 = vpop.permute.xlu0 %1834
        %1838 = vset.pattern.permute.xlu0 0
        %1839 = vperm.xlu0 %1838, %v1725
        %v1840 = vpop.permute.xlu0 %1839
        %1843 = vset.pattern.permute.xlu0 0
        %1844 = vperm.xlu0 %1843, %v1726
        %v1845 = vpop.permute.xlu0 %1844
        %1848 = vset.pattern.permute.xlu0 0
        %1849 = vperm.xlu0 %1848, %v1727
        %v1850 = vpop.permute.xlu0 %1849
        %1853 = vset.pattern.permute.xlu0 0
        %1854 = vperm.xlu0 %1853, %v1728
        %v1855 = vpop.permute.xlu0 %1854
        %1858 = vset.pattern.permute.xlu0 0
        %1859 = vperm.xlu0 %1858, %v1729
        %v1860 = vpop.permute.xlu0 %1859
        %1863 = vset.pattern.permute.xlu0 0
        %1864 = vperm.xlu0 %1863, %v1730
        %v1865 = vpop.permute.xlu0 %1864
        %1868 = vset.pattern.permute.xlu0 0
        %1869 = vperm.xlu0 %1868, %v1731
        %v1870 = vpop.permute.xlu0 %1869
        %1873 = vset.pattern.permute.xlu0 0
        %1874 = vperm.xlu0 %1873, %v1732
        %v1875 = vpop.permute.xlu0 %1874
        %1878 = vset.pattern.permute.xlu0 0
        %1879 = vperm.xlu0 %1878, %v1733
        %v1880 = vpop.permute.xlu0 %1879
        %1883 = vset.pattern.permute.xlu0 0
        %1884 = vperm.xlu0 %1883, %v1734
        %v1885 = vpop.permute.xlu0 %1884
        %1888 = vset.pattern.permute.xlu0 0
        %1889 = vperm.xlu0 %1888, %v1735
        %v1890 = vpop.permute.xlu0 %1889
        %1893 = vset.pattern.permute.xlu0 0
        %1894 = vperm.xlu0 %1893, %v1736
        %v1895 = vpop.permute.xlu0 %1894
        %1898 = vset.pattern.permute.xlu0 0
        %1899 = vperm.xlu0 %1898, %v1737
        %v1900 = vpop.permute.xlu0 %1899
        %1903 = vset.pattern.permute.xlu0 0
        %1904 = vperm.xlu0 %1903, %v1738
        %v1905 = vpop.permute.xlu0 %1904
        %1908 = vset.pattern.permute.xlu0 0
        %1909 = vperm.xlu0 %1908, %v1739
        %v1910 = vpop.permute.xlu0 %1909
        %1913 = vset.pattern.permute.xlu0 0
        %1914 = vperm.xlu0 %1913, %v1740
        %v1915 = vpop.permute.xlu0 %1914
        %1918 = vset.pattern.permute.xlu0 0
        %1919 = vperm.xlu0 %1918, %v1741
        %v1920 = vpop.permute.xlu0 %1919
        %1923 = vset.pattern.permute.xlu0 0
        %1924 = vperm.xlu0 %1923, %v1742
        %v1925 = vpop.permute.xlu0 %1924
        %1928 = vset.pattern.permute.xlu0 0
        %1929 = vperm.xlu0 %1928, %v1743
        %v1930 = vpop.permute.xlu0 %1929
        %1933 = vset.pattern.permute.xlu0 0
        %1934 = vperm.xlu0 %1933, %v1744
        %v1935 = vpop.permute.xlu0 %1934
        %1938 = vset.pattern.permute.xlu0 0
        %1939 = vperm.xlu0 %1938, %v1745
        %v1940 = vpop.permute.xlu0 %1939
        %1943 = vset.pattern.permute.xlu0 0
        %1944 = vperm.xlu0 %1943, %v1746
        %v1945 = vpop.permute.xlu0 %1944
        %v1987 = vunpack.c.l.b16 %v1657
        %v1988 = vunpack.c.h.b16 %v1657
        %v1989 = vunpack.c.l.b16 %v1658
        %v1990 = vunpack.c.h.b16 %v1658
        %v1991 = vunpack.c.l.b16 %v1659
        %v1992 = vunpack.c.h.b16 %v1659
        %v1993 = vunpack.c.l.b16 %v1660
        %v1994 = vunpack.c.h.b16 %v1660
        %v1995 = vunpack.c.l.b16 %v1661
        %v1996 = vunpack.c.h.b16 %v1661
        %v1997 = vunpack.c.l.b16 %v1662
        %v1998 = vunpack.c.h.b16 %v1662
        %v1999 = vunpack.c.l.b16 %v1663
        %v2000 = vunpack.c.h.b16 %v1663
        %v2001 = vunpack.c.l.b16 %v1664
        %v2002 = vunpack.c.h.b16 %v1664
        %v2003 = vunpack.c.l.b16 %v1665
        %v2004 = vunpack.c.h.b16 %v1665
        %v2005 = vunpack.c.l.b16 %v1666
        %v2006 = vunpack.c.h.b16 %v1666
        %v2007 = vunpack.c.l.b16 %v1667
        %v2008 = vunpack.c.h.b16 %v1667
        %v2009 = vunpack.c.l.b16 %v1668
        %v2010 = vunpack.c.h.b16 %v1668
        %v2011 = vunpack.c.l.b16 %v1669
        %v2012 = vunpack.c.h.b16 %v1669
        %v2013 = vunpack.c.l.b16 %v1670
        %v2014 = vunpack.c.h.b16 %v1670
        %v2015 = vunpack.c.l.b16 %v1671
        %v2016 = vunpack.c.h.b16 %v1671
        %v2017 = vunpack.c.l.b16 %v1672
        %v2018 = vunpack.c.h.b16 %v1672
        %v2019 = vunpack.c.l.b16 %v1673
        %v2020 = vunpack.c.h.b16 %v1673
        %v2021 = vunpack.c.l.b16 %v1674
        %v2022 = vunpack.c.h.b16 %v1674
        %v2023 = vunpack.c.l.b16 %v1675
        %v2024 = vunpack.c.h.b16 %v1675
        %v2025 = vunpack.c.l.b16 %v1676
        %v2026 = vunpack.c.h.b16 %v1676
        %v2027 = vunpack.c.l.b16 %v1677
        %v2028 = vunpack.c.h.b16 %v1677
        %v2029 = vunpack.c.l.b16 %v1678
        %v2030 = vunpack.c.h.b16 %v1678
        %v2031 = vunpack.c.l.b16 %v1679
        %v2032 = vunpack.c.h.b16 %v1679
        %v2033 = vunpack.c.l.b16 %v1680
        %v2034 = vunpack.c.h.b16 %v1680
        %v2035 = vunpack.c.l.b16 %v1681
        %v2036 = vunpack.c.h.b16 %v1681
        %v2037 = vunpack.c.l.b16 %v1682
        %v2038 = vunpack.c.h.b16 %v1682
        %v2039 = vunpack.c.l.b16 %v1683
        %v2040 = vunpack.c.h.b16 %v1683
        %v2041 = vunpack.c.l.b16 %v1684
        %v2042 = vunpack.c.h.b16 %v1684
        %v2043 = vunpack.c.l.b16 %v1685
        %v2044 = vunpack.c.h.b16 %v1685
        %v2045 = vunpack.c.l.b16 %v1686
        %v2046 = vunpack.c.h.b16 %v1686
        %v2047 = vunpack.c.l.b16 %v1687
        %v2048 = vunpack.c.h.b16 %v1687
        %v2049 = vunpack.c.l.b16 %v1688
        %v2050 = vunpack.c.h.b16 %v1688
        %v2051 = vunpack.c.l.b16 %v1689
        %v2052 = vunpack.c.h.b16 %v1689
        %v2053 = vunpack.c.l.b16 %v1690
        %v2054 = vunpack.c.h.b16 %v1690
        %v2055 = vunpack.c.l.b16 %v1691
        %v2056 = vunpack.c.h.b16 %v1691
        %v2057 = vunpack.c.l.b16 %v1692
        %v2058 = vunpack.c.h.b16 %v1692
        %v2059 = vunpack.c.l.b16 %v1693
        %v2060 = vunpack.c.h.b16 %v1693
        %v2061 = vunpack.c.l.b16 %v1694
        %v2062 = vunpack.c.h.b16 %v1694
        %v2063 = vunpack.c.l.b16 %v1695
        %v2064 = vunpack.c.h.b16 %v1695
        %v2065 = vunpack.c.l.b16 %v1696
        %v2066 = vunpack.c.h.b16 %v1696
        %v2067 = vpack.c.b16 %v1989, %v1987
        %v2068 = vpack.c.b16 %v1990, %v1988
        %v2069 = vpack.c.b16 %v1993, %v1991
        %v2070 = vpack.c.b16 %v1994, %v1992
        %v2071 = vpack.c.b16 %v1997, %v1995
        %v2072 = vpack.c.b16 %v1998, %v1996
        %v2073 = vpack.c.b16 %v2001, %v1999
        %v2074 = vpack.c.b16 %v2002, %v2000
        %v2075 = vpack.c.b16 %v2005, %v2003
        %v2076 = vpack.c.b16 %v2006, %v2004
        %v2077 = vpack.c.b16 %v2009, %v2007
        %v2078 = vpack.c.b16 %v2010, %v2008
        %v2079 = vpack.c.b16 %v2013, %v2011
        %v2080 = vpack.c.b16 %v2014, %v2012
        %v2081 = vpack.c.b16 %v2017, %v2015
        %v2082 = vpack.c.b16 %v2018, %v2016
        %v2083 = vpack.c.b16 %v2021, %v2019
        %v2084 = vpack.c.b16 %v2022, %v2020
        %v2085 = vpack.c.b16 %v2025, %v2023
        %v2086 = vpack.c.b16 %v2026, %v2024
        %v2087 = vpack.c.b16 %v2029, %v2027
        %v2088 = vpack.c.b16 %v2030, %v2028
        %v2089 = vpack.c.b16 %v2033, %v2031
        %v2090 = vpack.c.b16 %v2034, %v2032
        %v2091 = vpack.c.b16 %v2037, %v2035
        %v2092 = vpack.c.b16 %v2038, %v2036
        %v2093 = vpack.c.b16 %v2041, %v2039
        %v2094 = vpack.c.b16 %v2042, %v2040
        %v2095 = vpack.c.b16 %v2045, %v2043
        %v2096 = vpack.c.b16 %v2046, %v2044
        %v2097 = vpack.c.b16 %v2049, %v2047
        %v2098 = vpack.c.b16 %v2050, %v2048
        %v2099 = vpack.c.b16 %v2053, %v2051
        %v2100 = vpack.c.b16 %v2054, %v2052
        %v2101 = vpack.c.b16 %v2057, %v2055
        %v2102 = vpack.c.b16 %v2058, %v2056
        %v2103 = vpack.c.b16 %v2061, %v2059
        %v2104 = vpack.c.b16 %v2062, %v2060
        %v2105 = vpack.c.b16 %v2065, %v2063
        %v2106 = vpack.c.b16 %v2066, %v2064
        %vm2127 = vcmask 261120
        %v2129 = vsel %vm2127, %v2068, 0
        %v2132 = vsel %vm2127, %v2070, 0
        %v2135 = vsel %vm2127, %v2072, 0
        %v2138 = vsel %vm2127, %v2074, 0
        %v2141 = vsel %vm2127, %v2076, 0
        %v2144 = vsel %vm2127, %v2078, 0
        %v2147 = vsel %vm2127, %v2080, 0
        %v2150 = vsel %vm2127, %v2082, 0
        %v2153 = vsel %vm2127, %v2084, 0
        %v2156 = vsel %vm2127, %v2086, 0
        %v2159 = vsel %vm2127, %v2088, 0
        %v2162 = vsel %vm2127, %v2090, 0
        %v2165 = vsel %vm2127, %v2092, 0
        %v2168 = vsel %vm2127, %v2094, 0
        %v2171 = vsel %vm2127, %v2096, 0
        %v2174 = vsel %vm2127, %v2098, 0
        %v2177 = vsel %vm2127, %v2100, 0
        %v2180 = vsel %vm2127, %v2102, 0
        %v2183 = vsel %vm2127, %v2104, 0
        %v2186 = vsel %vm2127, %v2106, 0
        %2188 = vmatpush.bf16.msra.mxu0 %v1704
        %2189 = vmatpush.bf16.msra.mxu0 %v1703
        %2190 = vmatpush.bf16.msra.mxu0 %v1702
        %2191 = vmatpush.bf16.msra.mxu0 %v1701
        %2192 = vmatpush.bf16.msra.mxu0 %v1700
        %2193 = vmatpush.bf16.msra.mxu0 %v1699
        %2194 = vmatpush.bf16.msra.mxu0 %v1698
        %2195 = vmatpush.bf16.msra.mxu0 %v1697
        %2196 = vmatmul.bf16.gmra.mxu0 %v2067
        %v2197 = vpop.f32.mrf.mxu0
        %v2198 = vadd.f32 %v1750, %v2197
        %v2199 = vpop.f32.mrf.mxu0
        %v2200 = vadd.f32 %v1755, %v2199
        %2201 = vmatmul.bf16.gmra.mxu0 %v2069
        %v2202 = vpop.f32.mrf.mxu0
        %v2203 = vadd.f32 %v1760, %v2202
        %v2204 = vpop.f32.mrf.mxu0
        %v2205 = vadd.f32 %v1765, %v2204
        %2206 = vmatmul.bf16.gmra.mxu0 %v2071
        %v2207 = vpop.f32.mrf.mxu0
        %v2208 = vadd.f32 %v1770, %v2207
        %v2209 = vpop.f32.mrf.mxu0
        %v2210 = vadd.f32 %v1775, %v2209
        %2211 = vmatmul.bf16.gmra.mxu0 %v2073
        %v2212 = vpop.f32.mrf.mxu0
        %v2213 = vadd.f32 %v1780, %v2212
        %v2214 = vpop.f32.mrf.mxu0
        %v2215 = vadd.f32 %v1785, %v2214
        %2216 = vmatmul.bf16.gmra.mxu0 %v2075
        %v2217 = vpop.f32.mrf.mxu0
        %v2218 = vadd.f32 %v1790, %v2217
        %v2219 = vpop.f32.mrf.mxu0
        %v2220 = vadd.f32 %v1795, %v2219
        %2221 = vmatmul.bf16.gmra.mxu0 %v2077
        %v2222 = vpop.f32.mrf.mxu0
        %v2223 = vadd.f32 %v1800, %v2222
        %v2224 = vpop.f32.mrf.mxu0
        %v2225 = vadd.f32 %v1805, %v2224
        %2226 = vmatmul.bf16.gmra.mxu0 %v2079
        %v2227 = vpop.f32.mrf.mxu0
        %v2228 = vadd.f32 %v1810, %v2227
        %v2229 = vpop.f32.mrf.mxu0
        %v2230 = vadd.f32 %v1815, %v2229
        %2231 = vmatmul.bf16.gmra.mxu0 %v2081
        %v2232 = vpop.f32.mrf.mxu0
        %v2233 = vadd.f32 %v1820, %v2232
        %v2234 = vpop.f32.mrf.mxu0
        %v2235 = vadd.f32 %v1825, %v2234
        %2236 = vmatmul.bf16.gmra.mxu0 %v2083
        %v2237 = vpop.f32.mrf.mxu0
        %v2238 = vadd.f32 %v1830, %v2237
        %v2239 = vpop.f32.mrf.mxu0
        %v2240 = vadd.f32 %v1835, %v2239
        %2241 = vmatmul.bf16.gmra.mxu0 %v2085
        %v2242 = vpop.f32.mrf.mxu0
        %v2243 = vadd.f32 %v1840, %v2242
        %v2244 = vpop.f32.mrf.mxu0
        %v2245 = vadd.f32 %v1845, %v2244
        %2246 = vmatmul.bf16.gmra.mxu0 %v2087
        %v2247 = vpop.f32.mrf.mxu0
        %v2248 = vadd.f32 %v1850, %v2247
        %v2249 = vpop.f32.mrf.mxu0
        %v2250 = vadd.f32 %v1855, %v2249
        %2251 = vmatmul.bf16.gmra.mxu0 %v2089
        %v2252 = vpop.f32.mrf.mxu0
        %v2253 = vadd.f32 %v1860, %v2252
        %v2254 = vpop.f32.mrf.mxu0
        %v2255 = vadd.f32 %v1865, %v2254
        %2256 = vmatmul.bf16.gmra.mxu0 %v2091
        %v2257 = vpop.f32.mrf.mxu0
        %v2258 = vadd.f32 %v1870, %v2257
        %v2259 = vpop.f32.mrf.mxu0
        %v2260 = vadd.f32 %v1875, %v2259
        %2261 = vmatmul.bf16.gmra.mxu0 %v2093
        %v2262 = vpop.f32.mrf.mxu0
        %v2263 = vadd.f32 %v1880, %v2262
        %v2264 = vpop.f32.mrf.mxu0
        %v2265 = vadd.f32 %v1885, %v2264
        %2266 = vmatmul.bf16.gmra.mxu0 %v2095
        %v2267 = vpop.f32.mrf.mxu0
        %v2268 = vadd.f32 %v1890, %v2267
        %v2269 = vpop.f32.mrf.mxu0
        %v2270 = vadd.f32 %v1895, %v2269
        %2271 = vmatmul.bf16.gmra.mxu0 %v2097
        %v2272 = vpop.f32.mrf.mxu0
        %v2273 = vadd.f32 %v1900, %v2272
        %v2274 = vpop.f32.mrf.mxu0
        %v2275 = vadd.f32 %v1905, %v2274
        %2276 = vmatmul.bf16.gmra.mxu0 %v2099
        %v2277 = vpop.f32.mrf.mxu0
        %v2278 = vadd.f32 %v1910, %v2277
        %v2279 = vpop.f32.mrf.mxu0
        %v2280 = vadd.f32 %v1915, %v2279
        %2281 = vmatmul.bf16.gmra.mxu0 %v2101
        %v2282 = vpop.f32.mrf.mxu0
        %v2283 = vadd.f32 %v1920, %v2282
        %v2284 = vpop.f32.mrf.mxu0
        %v2285 = vadd.f32 %v1925, %v2284
        %2286 = vmatmul.bf16.gmra.mxu0 %v2103
        %v2287 = vpop.f32.mrf.mxu0
        %v2288 = vadd.f32 %v1930, %v2287
        %v2289 = vpop.f32.mrf.mxu0
        %v2290 = vadd.f32 %v1935, %v2289
        %2291 = vmatmul.bf16.gmra.mxu0 %v2105
        %v2292 = vpop.f32.mrf.mxu0
        %v2293 = vadd.f32 %v1940, %v2292
        %v2294 = vpop.f32.mrf.mxu0
        %v2295 = vadd.f32 %v1945, %v2294
        %2296 = vdwg.mxu0
        %2297 = vmatpush.bf16.msra.mxu0 0
        %2298 = vmatpush.bf16.msra.mxu0 0
        %2299 = vmatpush.bf16.msra.mxu0 0
        %2300 = vmatpush.bf16.msra.mxu0 0
        %2301 = vmatpush.bf16.msra.mxu0 0
        %2302 = vmatpush.bf16.msra.mxu0 0
        %2303 = vmatpush.bf16.msra.mxu0 %v1706
        %2304 = vmatpush.bf16.msra.mxu0 %v1705
        %2305 = vmatmul.bf16.gmra.mxu0 %v2129
        %v2306 = vpop.f32.mrf.mxu0
        %v2307 = vadd.f32 %v2198, %v2306
        %v2308 = vpop.f32.mrf.mxu0
        %v2309 = vadd.f32 %v2200, %v2308
        %2310 = vmatmul.bf16.gmra.mxu0 %v2132
        %v2311 = vpop.f32.mrf.mxu0
        %v2312 = vadd.f32 %v2203, %v2311
        %v2313 = vpop.f32.mrf.mxu0
        %v2314 = vadd.f32 %v2205, %v2313
        %2315 = vmatmul.bf16.gmra.mxu0 %v2135
        %v2316 = vpop.f32.mrf.mxu0
        %v2317 = vadd.f32 %v2208, %v2316
        %v2318 = vpop.f32.mrf.mxu0
        %v2319 = vadd.f32 %v2210, %v2318
        %2320 = vmatmul.bf16.gmra.mxu0 %v2138
        %v2321 = vpop.f32.mrf.mxu0
        %v2322 = vadd.f32 %v2213, %v2321
        %v2323 = vpop.f32.mrf.mxu0
        %v2324 = vadd.f32 %v2215, %v2323
        %2325 = vmatmul.bf16.gmra.mxu0 %v2141
        %v2326 = vpop.f32.mrf.mxu0
        %v2327 = vadd.f32 %v2218, %v2326
        %v2328 = vpop.f32.mrf.mxu0
        %v2329 = vadd.f32 %v2220, %v2328
        %2330 = vmatmul.bf16.gmra.mxu0 %v2144
        %v2331 = vpop.f32.mrf.mxu0
        %v2332 = vadd.f32 %v2223, %v2331
        %v2333 = vpop.f32.mrf.mxu0
        %v2334 = vadd.f32 %v2225, %v2333
        %2335 = vmatmul.bf16.gmra.mxu0 %v2147
        %v2336 = vpop.f32.mrf.mxu0
        %v2337 = vadd.f32 %v2228, %v2336
        %v2338 = vpop.f32.mrf.mxu0
        %v2339 = vadd.f32 %v2230, %v2338
        %2340 = vmatmul.bf16.gmra.mxu0 %v2150
        %v2341 = vpop.f32.mrf.mxu0
        %v2342 = vadd.f32 %v2233, %v2341
        %v2343 = vpop.f32.mrf.mxu0
        %v2344 = vadd.f32 %v2235, %v2343
        %2345 = vmatmul.bf16.gmra.mxu0 %v2153
        %v2346 = vpop.f32.mrf.mxu0
        %v2347 = vadd.f32 %v2238, %v2346
        %v2348 = vpop.f32.mrf.mxu0
        %v2349 = vadd.f32 %v2240, %v2348
        %2350 = vmatmul.bf16.gmra.mxu0 %v2156
        %v2351 = vpop.f32.mrf.mxu0
        %v2352 = vadd.f32 %v2243, %v2351
        %v2353 = vpop.f32.mrf.mxu0
        %v2354 = vadd.f32 %v2245, %v2353
        %2355 = vmatmul.bf16.gmra.mxu0 %v2159
        %v2356 = vpop.f32.mrf.mxu0
        %v2357 = vadd.f32 %v2248, %v2356
        %v2358 = vpop.f32.mrf.mxu0
        %v2359 = vadd.f32 %v2250, %v2358
        %2360 = vmatmul.bf16.gmra.mxu0 %v2162
        %v2361 = vpop.f32.mrf.mxu0
        %v2362 = vadd.f32 %v2253, %v2361
        %v2363 = vpop.f32.mrf.mxu0
        %v2364 = vadd.f32 %v2255, %v2363
        %2365 = vmatmul.bf16.gmra.mxu0 %v2165
        %v2366 = vpop.f32.mrf.mxu0
        %v2367 = vadd.f32 %v2258, %v2366
        %v2368 = vpop.f32.mrf.mxu0
        %v2369 = vadd.f32 %v2260, %v2368
        %2370 = vmatmul.bf16.gmra.mxu0 %v2168
        %v2371 = vpop.f32.mrf.mxu0
        %v2372 = vadd.f32 %v2263, %v2371
        %v2373 = vpop.f32.mrf.mxu0
        %v2374 = vadd.f32 %v2265, %v2373
        %2375 = vmatmul.bf16.gmra.mxu0 %v2171
        %v2376 = vpop.f32.mrf.mxu0
        %v2377 = vadd.f32 %v2268, %v2376
        %v2378 = vpop.f32.mrf.mxu0
        %v2379 = vadd.f32 %v2270, %v2378
        %2380 = vmatmul.bf16.gmra.mxu0 %v2174
        %v2381 = vpop.f32.mrf.mxu0
        %v2382 = vadd.f32 %v2273, %v2381
        %v2383 = vpop.f32.mrf.mxu0
        %v2384 = vadd.f32 %v2275, %v2383
        %2385 = vmatmul.bf16.gmra.mxu0 %v2177
        %v2386 = vpop.f32.mrf.mxu0
        %v2387 = vadd.f32 %v2278, %v2386
        %v2388 = vpop.f32.mrf.mxu0
        %v2389 = vadd.f32 %v2280, %v2388
        %2390 = vmatmul.bf16.gmra.mxu0 %v2180
        %v2391 = vpop.f32.mrf.mxu0
        %v2392 = vadd.f32 %v2283, %v2391
        %v2393 = vpop.f32.mrf.mxu0
        %v2394 = vadd.f32 %v2285, %v2393
        %2395 = vmatmul.bf16.gmra.mxu0 %v2183
        %v2396 = vpop.f32.mrf.mxu0
        %v2397 = vadd.f32 %v2288, %v2396
        %v2398 = vpop.f32.mrf.mxu0
        %v2399 = vadd.f32 %v2290, %v2398
        %2400 = vmatmul.bf16.gmra.mxu0 %v2186
        %v2401 = vpop.f32.mrf.mxu0
        %v2402 = vadd.f32 %v2293, %v2401
        %v2403 = vpop.f32.mrf.mxu0
        %v2404 = vadd.f32 %v2295, %v2403
        %2405 = vdwg.mxu0
        %v2406 = vmax.f32 %v2307, 0.0
        %v2407 = vmax.f32 %v2309, 0.0
        %v2408 = vmax.f32 %v2312, 0.0
        %v2409 = vmax.f32 %v2314, 0.0
        %v2410 = vmax.f32 %v2317, 0.0
        %v2411 = vmax.f32 %v2319, 0.0
        %v2412 = vmax.f32 %v2322, 0.0
        %v2413 = vmax.f32 %v2324, 0.0
        %v2414 = vmax.f32 %v2327, 0.0
        %v2415 = vmax.f32 %v2329, 0.0
        %v2416 = vmax.f32 %v2332, 0.0
        %v2417 = vmax.f32 %v2334, 0.0
        %v2418 = vmax.f32 %v2337, 0.0
        %v2419 = vmax.f32 %v2339, 0.0
        %v2420 = vmax.f32 %v2342, 0.0
        %v2421 = vmax.f32 %v2344, 0.0
        %v2422 = vmax.f32 %v2347, 0.0
        %v2423 = vmax.f32 %v2349, 0.0
        %v2424 = vmax.f32 %v2352, 0.0
        %v2425 = vmax.f32 %v2354, 0.0
        %v2426 = vmax.f32 %v2357, 0.0
        %v2427 = vmax.f32 %v2359, 0.0
        %v2428 = vmax.f32 %v2362, 0.0
        %v2429 = vmax.f32 %v2364, 0.0
        %v2430 = vmax.f32 %v2367, 0.0
        %v2431 = vmax.f32 %v2369, 0.0
        %v2432 = vmax.f32 %v2372, 0.0
        %v2433 = vmax.f32 %v2374, 0.0
        %v2434 = vmax.f32 %v2377, 0.0
        %v2435 = vmax.f32 %v2379, 0.0
        %v2436 = vmax.f32 %v2382, 0.0
        %v2437 = vmax.f32 %v2384, 0.0
        %v2438 = vmax.f32 %v2387, 0.0
        %v2439 = vmax.f32 %v2389, 0.0
        %v2440 = vmax.f32 %v2392, 0.0
        %v2441 = vmax.f32 %v2394, 0.0
        %v2442 = vmax.f32 %v2397, 0.0
        %v2443 = vmax.f32 %v2399, 0.0
        %v2444 = vmax.f32 %v2402, 0.0
        %v2445 = vmax.f32 %v2404, 0.0
        %v2446 = vmax.f32 %v2406, %v2414
        %v2447 = vmax.f32 %v2407, %v2415
        %v2448 = vmax.f32 %v2408, %v2416
        %v2449 = vmax.f32 %v2409, %v2417
        %v2450 = vmax.f32 %v2410, %v2418
        %v2451 = vmax.f32 %v2411, %v2419
        %v2452 = vmax.f32 %v2412, %v2420
        %v2453 = vmax.f32 %v2413, %v2421
        %v2454 = vmax.f32 %v2414, %v2422
        %v2455 = vmax.f32 %v2415, %v2423
        %v2456 = vmax.f32 %v2416, %v2424
        %v2457 = vmax.f32 %v2417, %v2425
        %v2458 = vmax.f32 %v2418, %v2426
        %v2459 = vmax.f32 %v2419, %v2427
        %v2460 = vmax.f32 %v2420, %v2428
        %v2461 = vmax.f32 %v2421, %v2429
        %v2462 = vmax.f32 %v2422, %v2430
        %v2463 = vmax.f32 %v2423, %v2431
        %v2464 = vmax.f32 %v2424, %v2432
        %v2465 = vmax.f32 %v2425, %v2433
        %v2466 = vmax.f32 %v2426, %v2434
        %v2467 = vmax.f32 %v2427, %v2435
        %v2468 = vmax.f32 %v2428, %v2436
        %v2469 = vmax.f32 %v2429, %v2437
        %v2470 = vmax.f32 %v2446, %v2422
        %v2471 = vmax.f32 %v2447, %v2423
        %v2472 = vmax.f32 %v2448, %v2424
        %v2473 = vmax.f32 %v2449, %v2425
        %v2474 = vmax.f32 %v2450, %v2426
        %v2475 = vmax.f32 %v2451, %v2427
        %v2476 = vmax.f32 %v2452, %v2428
        %v2477 = vmax.f32 %v2453, %v2429
        %v2478 = vmax.f32 %v2454, %v2430
        %v2479 = vmax.f32 %v2455, %v2431
        %v2480 = vmax.f32 %v2456, %v2432
        %v2481 = vmax.f32 %v2457, %v2433
        %v2482 = vmax.f32 %v2458, %v2434
        %v2483 = vmax.f32 %v2459, %v2435
        %v2484 = vmax.f32 %v2460, %v2436
        %v2485 = vmax.f32 %v2461, %v2437
        %v2486 = vmax.f32 %v2462, %v2438
        %v2487 = vmax.f32 %v2463, %v2439
        %v2488 = vmax.f32 %v2464, %v2440
        %v2489 = vmax.f32 %v2465, %v2441
        %v2490 = vmax.f32 %v2466, %v2442
        %v2491 = vmax.f32 %v2467, %v2443
        %v2492 = vmax.f32 %v2468, %v2444
        %v2493 = vmax.f32 %v2469, %v2445
        %v2494 = vld [vmem:[%s13] sm:$0xff]
        %v2495 = vld [vmem:[%s13 + $0x8] sm:$0xff]
        %v2496 = vld [vmem:[%s13 + $0x10] sm:$0xff]
        %v2497 = vld [vmem:[%s13 + $0x18] sm:$0xff]
        %v2498 = vld [vmem:[%s13 + $0x20] sm:$0xff]
        %v2499 = vld [vmem:[%s13 + $0x28] sm:$0xff]
        %v2500 = vld [vmem:[%s13 + $0x30] sm:$0xff]
        %v2501 = vld [vmem:[%s13 + $0x38] sm:$0xff]
        %v2502 = vld [vmem:[%s13 + $0x40] sm:$0xff]
        %v2503 = vld [vmem:[%s13 + $0x48] sm:$0xff]
        %v2504 = vld [vmem:[%s13 + $0x50] sm:$0xff]
        %v2505 = vld [vmem:[%s13 + $0x58] sm:$0xff]
        %v2506 = vpack.c.bf16 %v2471, %v2470
        %v2507 = vpack.c.bf16 %v2473, %v2472
        %v2508 = vpack.c.bf16 %v2475, %v2474
        %v2509 = vpack.c.bf16 %v2477, %v2476
        %v2510 = vpack.c.bf16 %v2479, %v2478
        %v2511 = vpack.c.bf16 %v2481, %v2480
        %v2512 = vpack.c.bf16 %v2483, %v2482
        %v2513 = vpack.c.bf16 %v2485, %v2484
        %v2514 = vpack.c.bf16 %v2487, %v2486
        %v2515 = vpack.c.bf16 %v2489, %v2488
        %v2516 = vpack.c.bf16 %v2491, %v2490
        %v2517 = vpack.c.bf16 %v2493, %v2492
        %v2518 = vld [vmem:[%s14] sm:$0xff]
        %v2519 = vld [vmem:[%s14 + $0x8] sm:$0xff]
        %v2520 = vld [vmem:[%s14 + $0x10] sm:$0xff]
        %v2521 = vld [vmem:[%s14 + $0x18] sm:$0xff]
        %v2522 = vld [vmem:[%s14 + $0x20] sm:$0xff]
        %v2523 = vld [vmem:[%s14 + $0x28] sm:$0xff]
        %v2524 = vld [vmem:[%s14 + $0x30] sm:$0xff]
        %v2525 = vld [vmem:[%s14 + $0x38] sm:$0xff]
        %v2526 = vld [vmem:[%s14 + $0x40] sm:$0xff]
        %v2527 = vld [vmem:[%s14 + $0x48] sm:$0xff]
        %v2528 = vld [vmem:[%s14 + $0x50] sm:$0xff]
        %v2529 = vld [vmem:[%s14 + $0x58] sm:$0xff]
        %2531 = vset.pattern.permute.xlu0 0
        %2532 = vperm.xlu0 %2531, %v2518
        %v2533 = vpop.permute.xlu0 %2532
        %2536 = vset.pattern.permute.xlu0 0
        %2537 = vperm.xlu0 %2536, %v2519
        %v2538 = vpop.permute.xlu0 %2537
        %2541 = vset.pattern.permute.xlu0 0
        %2542 = vperm.xlu0 %2541, %v2520
        %v2543 = vpop.permute.xlu0 %2542
        %2546 = vset.pattern.permute.xlu0 0
        %2547 = vperm.xlu0 %2546, %v2521
        %v2548 = vpop.permute.xlu0 %2547
        %2551 = vset.pattern.permute.xlu0 0
        %2552 = vperm.xlu0 %2551, %v2522
        %v2553 = vpop.permute.xlu0 %2552
        %2556 = vset.pattern.permute.xlu0 0
        %2557 = vperm.xlu0 %2556, %v2523
        %v2558 = vpop.permute.xlu0 %2557
        %2561 = vset.pattern.permute.xlu0 0
        %2562 = vperm.xlu0 %2561, %v2524
        %v2563 = vpop.permute.xlu0 %2562
        %2566 = vset.pattern.permute.xlu0 0
        %2567 = vperm.xlu0 %2566, %v2525
        %v2568 = vpop.permute.xlu0 %2567
        %2571 = vset.pattern.permute.xlu0 0
        %2572 = vperm.xlu0 %2571, %v2526
        %v2573 = vpop.permute.xlu0 %2572
        %2576 = vset.pattern.permute.xlu0 0
        %2577 = vperm.xlu0 %2576, %v2527
        %v2578 = vpop.permute.xlu0 %2577
        %2581 = vset.pattern.permute.xlu0 0
        %2582 = vperm.xlu0 %2581, %v2528
        %v2583 = vpop.permute.xlu0 %2582
        %2586 = vset.pattern.permute.xlu0 0
        %2587 = vperm.xlu0 %2586, %v2529
        %v2588 = vpop.permute.xlu0 %2587
        %v2602 = vunpack.c.l.b16 %v2494
        %v2603 = vunpack.c.h.b16 %v2494
        %v2604 = vunpack.c.l.b16 %v2495
        %v2605 = vunpack.c.h.b16 %v2495
        %v2606 = vunpack.c.l.b16 %v2496
        %v2607 = vunpack.c.h.b16 %v2496
        %v2608 = vunpack.c.l.b16 %v2497
        %v2609 = vunpack.c.h.b16 %v2497
        %v2610 = vunpack.c.l.b16 %v2498
        %v2611 = vunpack.c.h.b16 %v2498
        %v2612 = vunpack.c.l.b16 %v2499
        %v2613 = vunpack.c.h.b16 %v2499
        %v2614 = vunpack.c.l.b16 %v2500
        %v2615 = vunpack.c.h.b16 %v2500
        %v2616 = vunpack.c.l.b16 %v2501
        %v2617 = vunpack.c.h.b16 %v2501
        %v2618 = vunpack.c.l.b16 %v2502
        %v2619 = vunpack.c.h.b16 %v2502
        %v2620 = vunpack.c.l.b16 %v2503
        %v2621 = vunpack.c.h.b16 %v2503
        %v2622 = vunpack.c.l.b16 %v2504
        %v2623 = vunpack.c.h.b16 %v2504
        %v2624 = vunpack.c.l.b16 %v2505
        %v2625 = vunpack.c.h.b16 %v2505
        %v2626 = vpack.c.b16 %v2604, %v2602
        %v2627 = vpack.c.b16 %v2605, %v2603
        %v2628 = vpack.c.b16 %v2608, %v2606
        %v2629 = vpack.c.b16 %v2609, %v2607
        %v2630 = vpack.c.b16 %v2612, %v2610
        %v2631 = vpack.c.b16 %v2613, %v2611
        %v2632 = vpack.c.b16 %v2616, %v2614
        %v2633 = vpack.c.b16 %v2617, %v2615
        %v2634 = vpack.c.b16 %v2620, %v2618
        %v2635 = vpack.c.b16 %v2621, %v2619
        %v2636 = vpack.c.b16 %v2624, %v2622
        %v2637 = vpack.c.b16 %v2625, %v2623
        %vm2644 = vcmask 523264
        %v2646 = vsel %vm2644, %v2627, 0
        %v2649 = vsel %vm2644, %v2629, 0
        %v2652 = vsel %vm2644, %v2631, 0
        %v2655 = vsel %vm2644, %v2633, 0
        %v2658 = vsel %vm2644, %v2635, 0
        %v2661 = vsel %vm2644, %v2637, 0
        %2663 = vmatpush.bf16.msra.mxu0 %v2513
        %2664 = vmatpush.bf16.msra.mxu0 %v2512
        %2665 = vmatpush.bf16.msra.mxu0 %v2511
        %2666 = vmatpush.bf16.msra.mxu0 %v2510
        %2667 = vmatpush.bf16.msra.mxu0 %v2509
        %2668 = vmatpush.bf16.msra.mxu0 %v2508
        %2669 = vmatpush.bf16.msra.mxu0 %v2507
        %2670 = vmatpush.bf16.msra.mxu0 %v2506
        %2671 = vmatmul.bf16.gmra.mxu0 %v2626
        %v2672 = vpop.f32.mrf.mxu0
        %v2673 = vadd.f32 %v2533, %v2672
        %v2674 = vpop.f32.mrf.mxu0
        %v2675 = vadd.f32 %v2538, %v2674
        %2676 = vmatmul.bf16.gmra.mxu0 %v2628
        %v2677 = vpop.f32.mrf.mxu0
        %v2678 = vadd.f32 %v2543, %v2677
        %v2679 = vpop.f32.mrf.mxu0
        %v2680 = vadd.f32 %v2548, %v2679
        %2681 = vmatmul.bf16.gmra.mxu0 %v2630
        %v2682 = vpop.f32.mrf.mxu0
        %v2683 = vadd.f32 %v2553, %v2682
        %v2684 = vpop.f32.mrf.mxu0
        %v2685 = vadd.f32 %v2558, %v2684
        %2686 = vmatmul.bf16.gmra.mxu0 %v2632
        %v2687 = vpop.f32.mrf.mxu0
        %v2688 = vadd.f32 %v2563, %v2687
        %v2689 = vpop.f32.mrf.mxu0
        %v2690 = vadd.f32 %v2568, %v2689
        %2691 = vmatmul.bf16.gmra.mxu0 %v2634
        %v2692 = vpop.f32.mrf.mxu0
        %v2693 = vadd.f32 %v2573, %v2692
        %v2694 = vpop.f32.mrf.mxu0
        %v2695 = vadd.f32 %v2578, %v2694
        %2696 = vmatmul.bf16.gmra.mxu0 %v2636
        %v2697 = vpop.f32.mrf.mxu0
        %v2698 = vadd.f32 %v2583, %v2697
        %v2699 = vpop.f32.mrf.mxu0
        %v2700 = vadd.f32 %v2588, %v2699
        %2701 = vdwg.mxu0
        %2702 = vmatpush.bf16.msra.mxu0 0
        %2703 = vmatpush.bf16.msra.mxu0 0
        %2704 = vmatpush.bf16.msra.mxu0 0
        %2705 = vmatpush.bf16.msra.mxu0 0
        %2706 = vmatpush.bf16.msra.mxu0 %v2517
        %2707 = vmatpush.bf16.msra.mxu0 %v2516
        %2708 = vmatpush.bf16.msra.mxu0 %v2515
        %2709 = vmatpush.bf16.msra.mxu0 %v2514
        %2710 = vmatmul.bf16.gmra.mxu0 %v2646
        %v2711 = vpop.f32.mrf.mxu0
        %v2712 = vadd.f32 %v2673, %v2711
        %v2713 = vpop.f32.mrf.mxu0
        %v2714 = vadd.f32 %v2675, %v2713
        %2715 = vmatmul.bf16.gmra.mxu0 %v2649
        %v2716 = vpop.f32.mrf.mxu0
        %v2717 = vadd.f32 %v2678, %v2716
        %v2718 = vpop.f32.mrf.mxu0
        %v2719 = vadd.f32 %v2680, %v2718
        %2720 = vmatmul.bf16.gmra.mxu0 %v2652
        %v2721 = vpop.f32.mrf.mxu0
        %v2722 = vadd.f32 %v2683, %v2721
        %v2723 = vpop.f32.mrf.mxu0
        %v2724 = vadd.f32 %v2685, %v2723
        %2725 = vmatmul.bf16.gmra.mxu0 %v2655
        %v2726 = vpop.f32.mrf.mxu0
        %v2727 = vadd.f32 %v2688, %v2726
        %v2728 = vpop.f32.mrf.mxu0
        %v2729 = vadd.f32 %v2690, %v2728
        %2730 = vmatmul.bf16.gmra.mxu0 %v2658
        %v2731 = vpop.f32.mrf.mxu0
        %v2732 = vadd.f32 %v2693, %v2731
        %v2733 = vpop.f32.mrf.mxu0
        %v2734 = vadd.f32 %v2695, %v2733
        %2735 = vmatmul.bf16.gmra.mxu0 %v2661
        %v2736 = vpop.f32.mrf.mxu0
        %v2737 = vadd.f32 %v2698, %v2736
        %v2738 = vpop.f32.mrf.mxu0
        %v2739 = vadd.f32 %v2700, %v2738
        %2740 = vdwg.mxu0
        %v2741 = vmax.f32 %v2712, 0.0
        %v2742 = vmax.f32 %v2714, 0.0
        %v2743 = vmax.f32 %v2717, 0.0
        %v2744 = vmax.f32 %v2719, 0.0
        %v2745 = vmax.f32 %v2722, 0.0
        %v2746 = vmax.f32 %v2724, 0.0
        %v2747 = vmax.f32 %v2727, 0.0
        %v2748 = vmax.f32 %v2729, 0.0
        %v2749 = vmax.f32 %v2732, 0.0
        %v2750 = vmax.f32 %v2734, 0.0
        %v2751 = vmax.f32 %v2737, 0.0
        %v2752 = vmax.f32 %v2739, 0.0
        %v2753 = vld [vmem:[%s15] sm:$0xf]
        %v2754 = vld [vmem:[%s15 + $0x4] sm:$0xf]
        %v2755 = vld [vmem:[%s15 + $0x8] sm:$0xf]
        %v2756 = vld [vmem:[%s15 + $0xc] sm:$0xf]
        %v2757 = vld [vmem:[%s15 + $0x10] sm:$0xf]
        %v2758 = vld [vmem:[%s15 + $0x14] sm:$0xf]
        %v2759 = vpack.c.bf16 %v2742, %v2741
        %v2760 = vpack.c.bf16 %v2744, %v2743
        %v2761 = vpack.c.bf16 %v2746, %v2745
        %v2762 = vpack.c.bf16 %v2748, %v2747
        %v2763 = vpack.c.bf16 %v2750, %v2749
        %v2764 = vpack.c.bf16 %v2752, %v2751
        %v2765 = vld [vmem:[%s16] sm:$0xff]
        %v2766 = vld [vmem:[%s16 + $0x8] sm:$0xff]
        %v2767 = vld [vmem:[%s16 + $0x10] sm:$0xff]
        %v2768 = vld [vmem:[%s16 + $0x18] sm:$0xff]
        %v2769 = vld [vmem:[%s16 + $0x20] sm:$0xff]
        %v2770 = vld [vmem:[%s16 + $0x28] sm:$0xff]
        %2772 = vset.pattern.permute.xlu0 0
        %2773 = vperm.xlu0 %2772, %v2765
        %v2774 = vpop.permute.xlu0 %2773
        %2777 = vset.pattern.permute.xlu0 0
        %2778 = vperm.xlu0 %2777, %v2766
        %v2779 = vpop.permute.xlu0 %2778
        %2782 = vset.pattern.permute.xlu0 0
        %2783 = vperm.xlu0 %2782, %v2767
        %v2784 = vpop.permute.xlu0 %2783
        %2787 = vset.pattern.permute.xlu0 0
        %2788 = vperm.xlu0 %2787, %v2768
        %v2789 = vpop.permute.xlu0 %2788
        %2792 = vset.pattern.permute.xlu0 0
        %2793 = vperm.xlu0 %2792, %v2769
        %v2794 = vpop.permute.xlu0 %2793
        %2797 = vset.pattern.permute.xlu0 0
        %2798 = vperm.xlu0 %2797, %v2770
        %v2799 = vpop.permute.xlu0 %2798
        %v2807 = vunpack.c.l.b16 %v2753
        %v2808 = vunpack.c.l.b16 %v2754
        %v2809 = vunpack.c.l.b16 %v2755
        %v2810 = vunpack.c.l.b16 %v2756
        %v2811 = vunpack.c.l.b16 %v2757
        %v2812 = vunpack.c.l.b16 %v2758
        %v2813 = vpack.c.b16 %v2808, %v2807
        %v2814 = vpack.c.b16 %v2810, %v2809
        %v2815 = vpack.c.b16 %v2812, %v2811
        %vm2816 = vcmask 785408
        %v2818 = vsel %vm2816, %v2813, 0
        %v2821 = vsel %vm2816, %v2814, 0
        %v2824 = vsel %vm2816, %v2815, 0
        %2826 = vmatpush.bf16.msra.mxu0 0
        %2827 = vmatpush.bf16.msra.mxu0 0
        %2828 = vmatpush.bf16.msra.mxu0 %v2764
        %2829 = vmatpush.bf16.msra.mxu0 %v2763
        %2830 = vmatpush.bf16.msra.mxu0 %v2762
        %2831 = vmatpush.bf16.msra.mxu0 %v2761
        %2832 = vmatpush.bf16.msra.mxu0 %v2760
        %2833 = vmatpush.bf16.msra.mxu0 %v2759
        %2834 = vmatmul.bf16.gmra.mxu0 %v2818
        %v2835 = vpop.f32.mrf.mxu0
        %v2836 = vadd.f32 %v2774, %v2835
        %v2837 = vpop.f32.mrf.mxu0
        %v2838 = vadd.f32 %v2779, %v2837
        %2839 = vmatmul.bf16.gmra.mxu0 %v2821
        %v2840 = vpop.f32.mrf.mxu0
        %v2841 = vadd.f32 %v2784, %v2840
        %v2842 = vpop.f32.mrf.mxu0
        %v2843 = vadd.f32 %v2789, %v2842
        %2844 = vmatmul.bf16.gmra.mxu0 %v2824
        %v2845 = vpop.f32.mrf.mxu0
        %v2846 = vadd.f32 %v2794, %v2845
        %v2847 = vpop.f32.mrf.mxu0
        %v2848 = vadd.f32 %v2799, %v2847
        %2849 = vdwg.mxu0
        %v2850 = vmax.f32 %v2836, 0.0
        %v2851 = vmax.f32 %v2838, 0.0
        %v2852 = vmax.f32 %v2841, 0.0
        %v2853 = vmax.f32 %v2843, 0.0
        %v2854 = vmax.f32 %v2846, 0.0
        %v2855 = vmax.f32 %v2848, 0.0
        %v2856 = vmax.f32 %v2850, %v2852
        %v2857 = vmax.f32 %v2851, %v2853
        %v2858 = vmax.f32 %v2856, %v2854
        %v2859 = vmax.f32 %v2857, %v2855
        %v2860 = vld [vmem:[%s17] sm:$0x1]
        %v2861 = vpack.c.bf16 %v2859, %v2858
        %v2862 = vld [vmem:[#allocation2] sm:$0x1]
        %2864 = vset.pattern.permute.xlu0 0
        %2865 = vperm.xlu0 %2864, %v2862
        %v2866 = vpop.permute.xlu0 %2865
        %v2868 = vperm.slane %v2866, 0
        %vm2869 = vcmask 130048
        %v2871 = vsel %vm2869, %v2860, 0
        %2873 = vmatpush.bf16.msra.mxu0 0
        %2874 = vmatpush.bf16.msra.mxu0 0
        %2875 = vmatpush.bf16.msra.mxu0 0
        %2876 = vmatpush.bf16.msra.mxu0 0
        %2877 = vmatpush.bf16.msra.mxu0 0
        %2878 = vmatpush.bf16.msra.mxu0 0
        %2879 = vmatpush.bf16.msra.mxu0 0
        %2880 = vmatpush.bf16.msra.mxu0 %v2861
        %2881 = vmatmul.bf16.gmra.mxu0 %v2871
        %v2882 = vpop.f32.mrf.mxu0
        %v2883 = vadd.f32 %v2868, %v2882
        %v2884 = vpop.f32.mrf.mxu0
        %2885 = vdwg.mxu0
        %2886 = vst [vmem:[%s609] sm:$0x1] %v2883
        %s2887 = sand.u32 %s447, 1
        %s2888 = scalar_lea.sflag [#allocation4], %s2887
        %s2889 = sand.u32 %s447, 1
        %s2890 = scalar_lea.vmem [#allocation3], %s2889
        // Predicated region
        $region97: #{tpu_custom_call.1} parent=95 // pred_check
          %p2891 = pneg %p457
        $region98: #{tpu_custom_call.1} parent=95 // pred_check_branch
          %2893 = sbr.rel (%p2891) target = $region100
        $region99: #{tpu_custom_call.1} parent=95 // pred_region
          %2895 = vsyncadd %s2888, 0
          %s2896 = scalar_lea.hbm %s19, %s35
          %s2898 = sshll.u32 %s2890, 4
          %s2899 = int_to_ptr.vmem [resolvable:$true] %s2898
          %s2900 = sshll.u32 %s2896, 4
          %s2901 = int_to_ptr.hbm [resolvable:$true] %s2900
          %2903 = dma.vmem_to_hbm [thread:$0]  %s2899, 16, %s2901, %s2888
        $region100: #{tpu_custom_call.1} parent=95 // pred_fallthru
          _
      $region96: #{tpu_custom_call.1} parent=5 // pred_fallthru
        _
      %p2904 = scmp.le.s32.totalorder 2, %s30
      // Predicated region
      $region101: #{tpu_custom_call.1} parent=5 // pred_check
        %p2905 = pneg %p2904
      $region102: #{tpu_custom_call.1} parent=5 // pred_check_branch
        %2907 = sbr.rel (%p2905) target = $region104
      $region103: #{tpu_custom_call.1} parent=5 // pred_region
        %s2908 = ssub.s32 %s30, 2
        // Predicated region
        $region105: #{tpu_custom_call.1} parent=103 // pred_check
          %p2909 = pneg %p463
        $region106: #{tpu_custom_call.1} parent=103 // pred_check_branch
          %2911 = sbr.rel (%p2909) target = $region108
        $region107: #{tpu_custom_call.1} parent=103 // pred_region
          %s2912 = sand.u32 %s448, 1
          %s2913 = scalar_lea.sflag [#allocation4], %s2912
          %s2914 = sand.u32 %s448, 1
          %s2915 = scalar_lea.vmem [#allocation3], %s2914
          %2917 = dma.done %s2913, 16
        $region108: #{tpu_custom_call.1} parent=103 // pred_fallthru
          _
      $region104: #{tpu_custom_call.1} parent=5 // pred_fallthru
        _
    $region6: #{tpu_custom_call.1} parent=1 // loop_footer
      %s34 = sadd.s32 1, %s30
    $region7: #{tpu_custom_call.1} parent=1 // loop_footer_branch
      %29 = sbr.rel target = $region3
    $region8: #{tpu_custom_call.1} parent=1 // loop_exit
      _
    %2918 = vsyncpa [#allocation4], 1
    %s2919 = scalar_lea.sflag [#allocation4], 1
    %2920 = vsyncpa %s2919, 1

</llo_original>
